<compile_context>
chip_gen: v7x
topology: tpu7x:2x2x1
jax: 0.10.0
libtpu: 0.0.40
codegen_flags: <defaults>
</compile_context>

<pallas_src>
import functools

import jax
import jax.numpy as jnp
import numpy as np
from jax import lax
from jax.experimental import pallas as pl
from jax.experimental.pallas import tpu as pltpu


def _spatial_attention_kernel(x_ref, w_ref, *rest, C, H, W, K, PAD, HAS_COL):
    """Per grid step (one batch element):
      x_ref  : (1, C, HWP) VMEM input slab, lane-dense (HWP = H*W padded to 128)
      w_ref  : (2, K*K)    VMEM conv weights (row 0: avg channel, row 1: max)
      col_ref: (1, HWP)    VMEM int32 column map (only if W is not a power of 2)
      o_ref  : (1, C, HWP) VMEM output slab
    """
    if HAS_COL:
        col_ref, o_ref = rest
    else:
        (o_ref,) = rest
    HWP = x_ref.shape[2]

    # ---- channel mean / max (x loaded for the reduction only, not kept live) ---
    x = x_ref[0].astype(jnp.float32)                          # (C, HWP)
    avg = jnp.sum(x, axis=0, keepdims=True) * jnp.float32(1.0 / C)
    mx = jnp.max(x, axis=0, keepdims=True)
    src = jnp.concatenate([avg, mx], axis=0)                  # (2, HWP) stacked
    del x

    # ---- validity masks, built once (padding handled implicitly) ---------------
    p = lax.broadcasted_iota(jnp.int32, (1, HWP), 1)          # flat pos h*W + w
    if HAS_COL:
        col = col_ref[...]                                    # w = p % W (host map)
    else:
        col = p & (W - 1)                                     # W is a power of two

    row_masks = []
    for kh in range(K):
        dh = kh - PAD
        row_masks.append((p >= -dh * W) & (p < (H - dh) * W))
    col_masks = []
    for kw in range(K):
        dw = kw - PAD
        col_masks.append((col >= -dw) & (col < W - dw))

    w2 = w_ref[...]                                           # (2, K*K) f32

    # ---- KxK conv on the stacked (avg, max) planes in flat space ---------------
    # Tap (dh, dw) == one lane roll by dh*W + dw + boundary masking.
    acc = None                                                # (2, HWP) running sum
    for kh in range(K):
        dh = kh - PAD
        acc_kh = None
        for kw in range(K):
            dw = kw - PAD
            shift = (-(dh * W + dw)) % HWP                    # static non-negative
            tap = src if shift == 0 else pltpu.roll(src, shift, axis=1)
            idx = kh * K + kw
            term = jnp.where(col_masks[kw], tap, 0.0) * w2[:, idx:idx + 1]
            acc_kh = term if acc_kh is None else acc_kh + term
        acc_kh = jnp.where(row_masks[kh], acc_kh, 0.0)        # row mask once per kh
        acc = acc_kh if acc is None else acc + acc_kh

    logit = jnp.sum(acc, axis=0, keepdims=True)               # (1, HWP): avg+max rows
    gate = jax.nn.sigmoid(logit)                              # EUP

    # ---- gating: re-read x from VMEM (cheap) + one full lane-dense store -------
    o_ref[0] = (x_ref[0] * gate.astype(x_ref.dtype)).astype(o_ref.dtype)


def spatial_attention(x, conv_w):
    """x: (B, C, H, W); conv_w: (1, 2, K, K) (PyTorch OIHW, Conv2d(2,1,K,bias=False))."""
    B, C, H, W = x.shape
    K = conv_w.shape[-1]
    assert K in (3, 7), "kernel size must be 3 or 7"
    PAD = K // 2
    HW = H * W
    HWP = ((HW + 127) // 128) * 128           # lane-dense: pad minor dim to 128

    # Wrapper-side layout plumbing (no-ops when HW is already a multiple of 128).
    x_flat = x.reshape(B, C, HW)
    if HWP != HW:
        x_flat = jnp.pad(x_flat, ((0, 0), (0, 0), (0, HWP - HW)))
    w2 = conv_w.astype(jnp.float32).reshape(2, K * K)

    has_col = (W & (W - 1)) != 0              # non power-of-two W -> host column map
    inputs = [x_flat, w2]
    in_specs = [
        pl.BlockSpec((1, C, HWP), lambda b: (b, 0, 0)),       # x: one batch per step
        pl.BlockSpec((2, K * K), lambda b: (0, 0)),           # conv weights (tiny)
    ]
    if has_col:
        col_map = (jnp.arange(HWP, dtype=jnp.int32) % W).reshape(1, HWP)
        inputs.append(col_map)
        in_specs.append(pl.BlockSpec((1, HWP), lambda b: (0, 0)))

    # VMEM budget: input + output blocks are double-buffered (~4 * C*HWP*itemsize).
    try:
        vmem_cap = pltpu.get_tpu_info().vmem_capacity_bytes
    except Exception:
        vmem_cap = 64 * 1024 * 1024           # conservative fallback (v7x per-TC)
    need = 4 * C * HWP * x.dtype.itemsize + (4 << 20)
    vmem_limit = int(min(max(need, 32 * 1024 * 1024), 0.75 * vmem_cap))

    kernel = functools.partial(
        _spatial_attention_kernel, C=C, H=H, W=W, K=K, PAD=PAD, HAS_COL=has_col
    )

    out_flat = pl.pallas_call(
        kernel,
        out_shape=jax.ShapeDtypeStruct((B, C, HWP), x.dtype),
        grid=(B,),
        in_specs=in_specs,
        out_specs=pl.BlockSpec((1, C, HWP), lambda b: (b, 0, 0)),
        compiler_params=pltpu.CompilerParams(
            dimension_semantics=("parallel",),   # shard batch across TensorCores
            vmem_limit_bytes=vmem_limit,
        ),
    )(*inputs)

    out = out_flat[:, :, :HW] if HWP != HW else out_flat
    return out.reshape(B, C, H, W)


def _reference(x, conv_w):
    avg = jnp.mean(x, axis=1, keepdims=True)
    mx = jnp.max(x, axis=1, keepdims=True)
    cat = jnp.concatenate([avg, mx], axis=1)
    pad = conv_w.shape[-1] // 2
    conv = lax.conv_general_dilated(
        cat,
        conv_w,
        window_strides=(1, 1),
        padding=[(pad, pad), (pad, pad)],
        dimension_numbers=("NCHW", "OIHW", "NCHW"),
    )
    return x * jax.nn.sigmoid(conv)


if __name__ == "__main__":
    key = jax.random.PRNGKey(0)
    k1, k2, k3, k4 = jax.random.split(key, 4)

    # Test 1: kernel_size=7, HW a multiple of 128, power-of-two W (in-kernel col).
    B, C, H, W = 2, 4, 16, 16
    x = jax.random.normal(k1, (B, C, H, W), dtype=jnp.float32)
    conv_w = 0.1 * jax.random.normal(k2, (1, 2, 7, 7), dtype=jnp.float32)
    out = jax.block_until_ready(spatial_attention(x, conv_w))
    ref = jax.block_until_ready(_reference(x, conv_w))
    assert out.shape == (B, C, H, W)
    np.testing.assert_allclose(np.asarray(out), np.asarray(ref), atol=1e-5, rtol=1e-5)

    # Test 2: kernel_size=3, HW not a multiple of 128 and W not a power of two
    # (exercises lane padding + host column-map path flagged in the review).
    B2, C2, H2, W2 = 2, 3, 6, 10
    x2 = jax.random.normal(k3, (B2, C2, H2, W2), dtype=jnp.float32)
    conv_w2 = 0.1 * jax.random.normal(k4, (1, 2, 3, 3), dtype=jnp.float32)
    out2 = jax.block_until_ready(spatial_attention(x2, conv_w2))
    ref2 = jax.block_until_ready(_reference(x2, conv_w2))
    np.testing.assert_allclose(np.asarray(out2), np.asarray(ref2), atol=1e-5, rtol=1e-5)

    print("KERNEL_OK")
</pallas_src>

<mosaic_0001>
module attributes {stable_mosaic.version = 11 : i64} {
  func.func @_spatial_attention_kernel(%arg0: i32, %arg1: memref<1x4x256xf32, #tpu.memory_space<vmem>>, %arg2: memref<2x49xf32, #tpu.memory_space<vmem>>, %arg3: memref<1x4x256xf32, #tpu.memory_space<vmem>>) attributes {dimension_semantics = [#tpu.dimension_semantics<parallel>], iteration_bounds = array<i64: 2>, scalar_prefetch = 0 : i64, scratch_operands = 0 : i64, tpu.core_type = #tpu.core_type<tc>, window_params = [{transform_indices = @transform_0, window_bounds = array<i64: 1, 4, 256>}, {pipeline_mode = #tpu.pipeline_mode<synchronous>, transform_indices = @transform_1, window_bounds = array<i64: 2, 49>}, {transform_indices = @transform_2, window_bounds = array<i64: 1, 4, 256>}]} {
    %c0 = arith.constant 0 : index
    %c0_0 = arith.constant 0 : index
    %c0_1 = arith.constant 0 : index
    %0 = vector.load %arg1[%c0, %c0_0, %c0_1] : memref<1x4x256xf32, #tpu.memory_space<vmem>>, vector<1x4x256xf32>
    %1 = vector.shape_cast %0 : vector<1x4x256xf32> to vector<4x256xf32>
    %cst = arith.constant dense<0.000000e+00> : vector<256xf32>
    %2 = vector.multi_reduction <add>, %1, %cst [0] : vector<4x256xf32> to vector<256xf32>
    %3 = vector.shape_cast %2 : vector<256xf32> to vector<1x256xf32>
    %cst_2 = arith.constant 2.500000e-01 : f32
    %4 = vector.broadcast %cst_2 : f32 to vector<1x256xf32>
    %5 = arith.mulf %3, %4 : vector<1x256xf32>
    %cst_3 = arith.constant dense<0xFF800000> : vector<256xf32>
    %6 = vector.multi_reduction <maximumf>, %1, %cst_3 [0] : vector<4x256xf32> to vector<256xf32>
    %7 = vector.shape_cast %6 : vector<256xf32> to vector<1x256xf32>
    %8 = tpu.concatenate %5, %7 in 0 : vector<1x256xf32>, vector<1x256xf32> -> vector<2x256xf32>
    %9 = tpu.iota {dimensions = array<i32: 1>} : vector<1x256xi32>
    %c15_i32 = arith.constant 15 : i32
    %10 = vector.broadcast %c15_i32 : i32 to vector<1x256xi32>
    %11 = arith.andi %9, %10 : vector<1x256xi32>
    %c48_i32 = arith.constant 48 : i32
    %12 = vector.broadcast %c48_i32 : i32 to vector<1x256xi32>
    %13 = arith.cmpi sge, %9, %12 : vector<1x256xi32>
    %c304_i32 = arith.constant 304 : i32
    %14 = vector.broadcast %c304_i32 : i32 to vector<1x256xi32>
    %15 = arith.cmpi slt, %9, %14 : vector<1x256xi32>
    %16 = arith.andi %13, %15 : vector<1x256xi1>
    %c32_i32 = arith.constant 32 : i32
    %17 = vector.broadcast %c32_i32 : i32 to vector<1x256xi32>
    %18 = arith.cmpi sge, %9, %17 : vector<1x256xi32>
    %c288_i32 = arith.constant 288 : i32
    %19 = vector.broadcast %c288_i32 : i32 to vector<1x256xi32>
    %20 = arith.cmpi slt, %9, %19 : vector<1x256xi32>
    %21 = arith.andi %18, %20 : vector<1x256xi1>
    %c16_i32 = arith.constant 16 : i32
    %22 = vector.broadcast %c16_i32 : i32 to vector<1x256xi32>
    %23 = arith.cmpi sge, %9, %22 : vector<1x256xi32>
    %c272_i32 = arith.constant 272 : i32
    %24 = vector.broadcast %c272_i32 : i32 to vector<1x256xi32>
    %25 = arith.cmpi slt, %9, %24 : vector<1x256xi32>
    %26 = arith.andi %23, %25 : vector<1x256xi1>
    %c0_i32 = arith.constant 0 : i32
    %27 = vector.broadcast %c0_i32 : i32 to vector<1x256xi32>
    %28 = arith.cmpi sge, %9, %27 : vector<1x256xi32>
    %c256_i32 = arith.constant 256 : i32
    %29 = vector.broadcast %c256_i32 : i32 to vector<1x256xi32>
    %30 = arith.cmpi slt, %9, %29 : vector<1x256xi32>
    %31 = arith.andi %28, %30 : vector<1x256xi1>
    %c-16_i32 = arith.constant -16 : i32
    %32 = vector.broadcast %c-16_i32 : i32 to vector<1x256xi32>
    %33 = arith.cmpi sge, %9, %32 : vector<1x256xi32>
    %c240_i32 = arith.constant 240 : i32
    %34 = vector.broadcast %c240_i32 : i32 to vector<1x256xi32>
    %35 = arith.cmpi slt, %9, %34 : vector<1x256xi32>
    %36 = arith.andi %33, %35 : vector<1x256xi1>
    %c-32_i32 = arith.constant -32 : i32
    %37 = vector.broadcast %c-32_i32 : i32 to vector<1x256xi32>
    %38 = arith.cmpi sge, %9, %37 : vector<1x256xi32>
    %c224_i32 = arith.constant 224 : i32
    %39 = vector.broadcast %c224_i32 : i32 to vector<1x256xi32>
    %40 = arith.cmpi slt, %9, %39 : vector<1x256xi32>
    %41 = arith.andi %38, %40 : vector<1x256xi1>
    %c-48_i32 = arith.constant -48 : i32
    %42 = vector.broadcast %c-48_i32 : i32 to vector<1x256xi32>
    %43 = arith.cmpi sge, %9, %42 : vector<1x256xi32>
    %c208_i32 = arith.constant 208 : i32
    %44 = vector.broadcast %c208_i32 : i32 to vector<1x256xi32>
    %45 = arith.cmpi slt, %9, %44 : vector<1x256xi32>
    %46 = arith.andi %43, %45 : vector<1x256xi1>
    %c3_i32 = arith.constant 3 : i32
    %47 = vector.broadcast %c3_i32 : i32 to vector<1x256xi32>
    %48 = arith.cmpi sge, %11, %47 : vector<1x256xi32>
    %c19_i32 = arith.constant 19 : i32
    %49 = vector.broadcast %c19_i32 : i32 to vector<1x256xi32>
    %50 = arith.cmpi slt, %11, %49 : vector<1x256xi32>
    %51 = arith.andi %48, %50 : vector<1x256xi1>
    %c2_i32 = arith.constant 2 : i32
    %52 = vector.broadcast %c2_i32 : i32 to vector<1x256xi32>
    %53 = arith.cmpi sge, %11, %52 : vector<1x256xi32>
    %c18_i32 = arith.constant 18 : i32
    %54 = vector.broadcast %c18_i32 : i32 to vector<1x256xi32>
    %55 = arith.cmpi slt, %11, %54 : vector<1x256xi32>
    %56 = arith.andi %53, %55 : vector<1x256xi1>
    %c1_i32 = arith.constant 1 : i32
    %57 = vector.broadcast %c1_i32 : i32 to vector<1x256xi32>
    %58 = arith.cmpi sge, %11, %57 : vector<1x256xi32>
    %c17_i32 = arith.constant 17 : i32
    %59 = vector.broadcast %c17_i32 : i32 to vector<1x256xi32>
    %60 = arith.cmpi slt, %11, %59 : vector<1x256xi32>
    %61 = arith.andi %58, %60 : vector<1x256xi1>
    %c0_i32_4 = arith.constant 0 : i32
    %62 = vector.broadcast %c0_i32_4 : i32 to vector<1x256xi32>
    %63 = arith.cmpi sge, %11, %62 : vector<1x256xi32>
    %c16_i32_5 = arith.constant 16 : i32
    %64 = vector.broadcast %c16_i32_5 : i32 to vector<1x256xi32>
    %65 = arith.cmpi slt, %11, %64 : vector<1x256xi32>
    %66 = arith.andi %63, %65 : vector<1x256xi1>
    %c-1_i32 = arith.constant -1 : i32
    %67 = vector.broadcast %c-1_i32 : i32 to vector<1x256xi32>
    %68 = arith.cmpi sge, %11, %67 : vector<1x256xi32>
    %c15_i32_6 = arith.constant 15 : i32
    %69 = vector.broadcast %c15_i32_6 : i32 to vector<1x256xi32>
    %70 = arith.cmpi slt, %11, %69 : vector<1x256xi32>
    %71 = arith.andi %68, %70 : vector<1x256xi1>
    %c-2_i32 = arith.constant -2 : i32
    %72 = vector.broadcast %c-2_i32 : i32 to vector<1x256xi32>
    %73 = arith.cmpi sge, %11, %72 : vector<1x256xi32>
    %c14_i32 = arith.constant 14 : i32
    %74 = vector.broadcast %c14_i32 : i32 to vector<1x256xi32>
    %75 = arith.cmpi slt, %11, %74 : vector<1x256xi32>
    %76 = arith.andi %73, %75 : vector<1x256xi1>
    %c-3_i32 = arith.constant -3 : i32
    %77 = vector.broadcast %c-3_i32 : i32 to vector<1x256xi32>
    %78 = arith.cmpi sge, %11, %77 : vector<1x256xi32>
    %c13_i32 = arith.constant 13 : i32
    %79 = vector.broadcast %c13_i32 : i32 to vector<1x256xi32>
    %80 = arith.cmpi slt, %11, %79 : vector<1x256xi32>
    %81 = arith.andi %78, %80 : vector<1x256xi1>
    %c0_7 = arith.constant 0 : index
    %c0_8 = arith.constant 0 : index
    %82 = vector.load %arg2[%c0_7, %c0_8] : memref<2x49xf32, #tpu.memory_space<vmem>>, vector<2x49xf32>
    %c51_i32 = arith.constant 51 : i32
    %83 = tpu.dynamic_rotate %8 by %c51_i32 dim 1 : vector<2x256xf32>, i32 -> vector<2x256xf32>
    %cst_9 = arith.constant 0.000000e+00 : f32
    %84 = vector.shape_cast %51 : vector<1x256xi1> to vector<1x256xi1>
    %85 = vector.broadcast %84 : vector<1x256xi1> to vector<2x256xi1>
    %86 = vector.broadcast %cst_9 : f32 to vector<2x256xf32>
    %87 = arith.select %85, %83, %86 : vector<2x256xi1>, vector<2x256xf32>
    %88 = vector.extract_strided_slice %82 {offsets = [0, 0], sizes = [2, 1], strides = [1, 1]} : vector<2x49xf32> to vector<2x1xf32>
    %89 = vector.broadcast %88 : vector<2x1xf32> to vector<2x256xf32>
    %90 = arith.mulf %87, %89 : vector<2x256xf32>
    %c50_i32 = arith.constant 50 : i32
    %91 = tpu.dynamic_rotate %8 by %c50_i32 dim 1 : vector<2x256xf32>, i32 -> vector<2x256xf32>
    %cst_10 = arith.constant 0.000000e+00 : f32
    %92 = vector.shape_cast %56 : vector<1x256xi1> to vector<1x256xi1>
    %93 = vector.broadcast %92 : vector<1x256xi1> to vector<2x256xi1>
    %94 = vector.broadcast %cst_10 : f32 to vector<2x256xf32>
    %95 = arith.select %93, %91, %94 : vector<2x256xi1>, vector<2x256xf32>
    %96 = vector.extract_strided_slice %82 {offsets = [0, 1], sizes = [2, 1], strides = [1, 1]} : vector<2x49xf32> to vector<2x1xf32>
    %97 = vector.broadcast %96 : vector<2x1xf32> to vector<2x256xf32>
    %98 = arith.mulf %95, %97 : vector<2x256xf32>
    %99 = arith.addf %90, %98 : vector<2x256xf32>
    %c49_i32 = arith.constant 49 : i32
    %100 = tpu.dynamic_rotate %8 by %c49_i32 dim 1 : vector<2x256xf32>, i32 -> vector<2x256xf32>
    %cst_11 = arith.constant 0.000000e+00 : f32
    %101 = vector.shape_cast %61 : vector<1x256xi1> to vector<1x256xi1>
    %102 = vector.broadcast %101 : vector<1x256xi1> to vector<2x256xi1>
    %103 = vector.broadcast %cst_11 : f32 to vector<2x256xf32>
    %104 = arith.select %102, %100, %103 : vector<2x256xi1>, vector<2x256xf32>
    %105 = vector.extract_strided_slice %82 {offsets = [0, 2], sizes = [2, 1], strides = [1, 1]} : vector<2x49xf32> to vector<2x1xf32>
    %106 = vector.broadcast %105 : vector<2x1xf32> to vector<2x256xf32>
    %107 = arith.mulf %104, %106 : vector<2x256xf32>
    %108 = arith.addf %99, %107 : vector<2x256xf32>
    %c48_i32_12 = arith.constant 48 : i32
    %109 = tpu.dynamic_rotate %8 by %c48_i32_12 dim 1 : vector<2x256xf32>, i32 -> vector<2x256xf32>
    %cst_13 = arith.constant 0.000000e+00 : f32
    %110 = vector.shape_cast %66 : vector<1x256xi1> to vector<1x256xi1>
    %111 = vector.broadcast %110 : vector<1x256xi1> to vector<2x256xi1>
    %112 = vector.broadcast %cst_13 : f32 to vector<2x256xf32>
    %113 = arith.select %111, %109, %112 : vector<2x256xi1>, vector<2x256xf32>
    %114 = vector.extract_strided_slice %82 {offsets = [0, 3], sizes = [2, 1], strides = [1, 1]} : vector<2x49xf32> to vector<2x1xf32>
    %115 = vector.broadcast %114 : vector<2x1xf32> to vector<2x256xf32>
    %116 = arith.mulf %113, %115 : vector<2x256xf32>
    %117 = arith.addf %108, %116 : vector<2x256xf32>
    %c47_i32 = arith.constant 47 : i32
    %118 = tpu.dynamic_rotate %8 by %c47_i32 dim 1 : vector<2x256xf32>, i32 -> vector<2x256xf32>
    %cst_14 = arith.constant 0.000000e+00 : f32
    %119 = vector.shape_cast %71 : vector<1x256xi1> to vector<1x256xi1>
    %120 = vector.broadcast %119 : vector<1x256xi1> to vector<2x256xi1>
    %121 = vector.broadcast %cst_14 : f32 to vector<2x256xf32>
    %122 = arith.select %120, %118, %121 : vector<2x256xi1>, vector<2x256xf32>
    %123 = vector.extract_strided_slice %82 {offsets = [0, 4], sizes = [2, 1], strides = [1, 1]} : vector<2x49xf32> to vector<2x1xf32>
    %124 = vector.broadcast %123 : vector<2x1xf32> to vector<2x256xf32>
    %125 = arith.mulf %122, %124 : vector<2x256xf32>
    %126 = arith.addf %117, %125 : vector<2x256xf32>
    %c46_i32 = arith.constant 46 : i32
    %127 = tpu.dynamic_rotate %8 by %c46_i32 dim 1 : vector<2x256xf32>, i32 -> vector<2x256xf32>
    %cst_15 = arith.constant 0.000000e+00 : f32
    %128 = vector.shape_cast %76 : vector<1x256xi1> to vector<1x256xi1>
    %129 = vector.broadcast %128 : vector<1x256xi1> to vector<2x256xi1>
    %130 = vector.broadcast %cst_15 : f32 to vector<2x256xf32>
    %131 = arith.select %129, %127, %130 : vector<2x256xi1>, vector<2x256xf32>
    %132 = vector.extract_strided_slice %82 {offsets = [0, 5], sizes = [2, 1], strides = [1, 1]} : vector<2x49xf32> to vector<2x1xf32>
    %133 = vector.broadcast %132 : vector<2x1xf32> to vector<2x256xf32>
    %134 = arith.mulf %131, %133 : vector<2x256xf32>
    %135 = arith.addf %126, %134 : vector<2x256xf32>
    %c45_i32 = arith.constant 45 : i32
    %136 = tpu.dynamic_rotate %8 by %c45_i32 dim 1 : vector<2x256xf32>, i32 -> vector<2x256xf32>
    %cst_16 = arith.constant 0.000000e+00 : f32
    %137 = vector.shape_cast %81 : vector<1x256xi1> to vector<1x256xi1>
    %138 = vector.broadcast %137 : vector<1x256xi1> to vector<2x256xi1>
    %139 = vector.broadcast %cst_16 : f32 to vector<2x256xf32>
    %140 = arith.select %138, %136, %139 : vector<2x256xi1>, vector<2x256xf32>
    %141 = vector.extract_strided_slice %82 {offsets = [0, 6], sizes = [2, 1], strides = [1, 1]} : vector<2x49xf32> to vector<2x1xf32>
    %142 = vector.broadcast %141 : vector<2x1xf32> to vector<2x256xf32>
    %143 = arith.mulf %140, %142 : vector<2x256xf32>
    %144 = arith.addf %135, %143 : vector<2x256xf32>
    %cst_17 = arith.constant 0.000000e+00 : f32
    %145 = vector.shape_cast %16 : vector<1x256xi1> to vector<1x256xi1>
    %146 = vector.broadcast %145 : vector<1x256xi1> to vector<2x256xi1>
    %147 = vector.broadcast %cst_17 : f32 to vector<2x256xf32>
    %148 = arith.select %146, %144, %147 : vector<2x256xi1>, vector<2x256xf32>
    %c35_i32 = arith.constant 35 : i32
    %149 = tpu.dynamic_rotate %8 by %c35_i32 dim 1 : vector<2x256xf32>, i32 -> vector<2x256xf32>
    %cst_18 = arith.constant 0.000000e+00 : f32
    %150 = vector.shape_cast %51 : vector<1x256xi1> to vector<1x256xi1>
    %151 = vector.broadcast %150 : vector<1x256xi1> to vector<2x256xi1>
    %152 = vector.broadcast %cst_18 : f32 to vector<2x256xf32>
    %153 = arith.select %151, %149, %152 : vector<2x256xi1>, vector<2x256xf32>
    %154 = vector.extract_strided_slice %82 {offsets = [0, 7], sizes = [2, 1], strides = [1, 1]} : vector<2x49xf32> to vector<2x1xf32>
    %155 = vector.broadcast %154 : vector<2x1xf32> to vector<2x256xf32>
    %156 = arith.mulf %153, %155 : vector<2x256xf32>
    %c34_i32 = arith.constant 34 : i32
    %157 = tpu.dynamic_rotate %8 by %c34_i32 dim 1 : vector<2x256xf32>, i32 -> vector<2x256xf32>
    %cst_19 = arith.constant 0.000000e+00 : f32
    %158 = vector.shape_cast %56 : vector<1x256xi1> to vector<1x256xi1>
    %159 = vector.broadcast %158 : vector<1x256xi1> to vector<2x256xi1>
    %160 = vector.broadcast %cst_19 : f32 to vector<2x256xf32>
    %161 = arith.select %159, %157, %160 : vector<2x256xi1>, vector<2x256xf32>
    %162 = vector.extract_strided_slice %82 {offsets = [0, 8], sizes = [2, 1], strides = [1, 1]} : vector<2x49xf32> to vector<2x1xf32>
    %163 = vector.broadcast %162 : vector<2x1xf32> to vector<2x256xf32>
    %164 = arith.mulf %161, %163 : vector<2x256xf32>
    %165 = arith.addf %156, %164 : vector<2x256xf32>
    %c33_i32 = arith.constant 33 : i32
    %166 = tpu.dynamic_rotate %8 by %c33_i32 dim 1 : vector<2x256xf32>, i32 -> vector<2x256xf32>
    %cst_20 = arith.constant 0.000000e+00 : f32
    %167 = vector.shape_cast %61 : vector<1x256xi1> to vector<1x256xi1>
    %168 = vector.broadcast %167 : vector<1x256xi1> to vector<2x256xi1>
    %169 = vector.broadcast %cst_20 : f32 to vector<2x256xf32>
    %170 = arith.select %168, %166, %169 : vector<2x256xi1>, vector<2x256xf32>
    %171 = vector.extract_strided_slice %82 {offsets = [0, 9], sizes = [2, 1], strides = [1, 1]} : vector<2x49xf32> to vector<2x1xf32>
    %172 = vector.broadcast %171 : vector<2x1xf32> to vector<2x256xf32>
    %173 = arith.mulf %170, %172 : vector<2x256xf32>
    %174 = arith.addf %165, %173 : vector<2x256xf32>
    %c32_i32_21 = arith.constant 32 : i32
    %175 = tpu.dynamic_rotate %8 by %c32_i32_21 dim 1 : vector<2x256xf32>, i32 -> vector<2x256xf32>
    %cst_22 = arith.constant 0.000000e+00 : f32
    %176 = vector.shape_cast %66 : vector<1x256xi1> to vector<1x256xi1>
    %177 = vector.broadcast %176 : vector<1x256xi1> to vector<2x256xi1>
    %178 = vector.broadcast %cst_22 : f32 to vector<2x256xf32>
    %179 = arith.select %177, %175, %178 : vector<2x256xi1>, vector<2x256xf32>
    %180 = vector.extract_strided_slice %82 {offsets = [0, 10], sizes = [2, 1], strides = [1, 1]} : vector<2x49xf32> to vector<2x1xf32>
    %181 = vector.broadcast %180 : vector<2x1xf32> to vector<2x256xf32>
    %182 = arith.mulf %179, %181 : vector<2x256xf32>
    %183 = arith.addf %174, %182 : vector<2x256xf32>
    %c31_i32 = arith.constant 31 : i32
    %184 = tpu.dynamic_rotate %8 by %c31_i32 dim 1 : vector<2x256xf32>, i32 -> vector<2x256xf32>
    %cst_23 = arith.constant 0.000000e+00 : f32
    %185 = vector.shape_cast %71 : vector<1x256xi1> to vector<1x256xi1>
    %186 = vector.broadcast %185 : vector<1x256xi1> to vector<2x256xi1>
    %187 = vector.broadcast %cst_23 : f32 to vector<2x256xf32>
    %188 = arith.select %186, %184, %187 : vector<2x256xi1>, vector<2x256xf32>
    %189 = vector.extract_strided_slice %82 {offsets = [0, 11], sizes = [2, 1], strides = [1, 1]} : vector<2x49xf32> to vector<2x1xf32>
    %190 = vector.broadcast %189 : vector<2x1xf32> to vector<2x256xf32>
    %191 = arith.mulf %188, %190 : vector<2x256xf32>
    %192 = arith.addf %183, %191 : vector<2x256xf32>
    %c30_i32 = arith.constant 30 : i32
    %193 = tpu.dynamic_rotate %8 by %c30_i32 dim 1 : vector<2x256xf32>, i32 -> vector<2x256xf32>
    %cst_24 = arith.constant 0.000000e+00 : f32
    %194 = vector.shape_cast %76 : vector<1x256xi1> to vector<1x256xi1>
    %195 = vector.broadcast %194 : vector<1x256xi1> to vector<2x256xi1>
    %196 = vector.broadcast %cst_24 : f32 to vector<2x256xf32>
    %197 = arith.select %195, %193, %196 : vector<2x256xi1>, vector<2x256xf32>
    %198 = vector.extract_strided_slice %82 {offsets = [0, 12], sizes = [2, 1], strides = [1, 1]} : vector<2x49xf32> to vector<2x1xf32>
    %199 = vector.broadcast %198 : vector<2x1xf32> to vector<2x256xf32>
    %200 = arith.mulf %197, %199 : vector<2x256xf32>
    %201 = arith.addf %192, %200 : vector<2x256xf32>
    %c29_i32 = arith.constant 29 : i32
    %202 = tpu.dynamic_rotate %8 by %c29_i32 dim 1 : vector<2x256xf32>, i32 -> vector<2x256xf32>
    %cst_25 = arith.constant 0.000000e+00 : f32
    %203 = vector.shape_cast %81 : vector<1x256xi1> to vector<1x256xi1>
    %204 = vector.broadcast %203 : vector<1x256xi1> to vector<2x256xi1>
    %205 = vector.broadcast %cst_25 : f32 to vector<2x256xf32>
    %206 = arith.select %204, %202, %205 : vector<2x256xi1>, vector<2x256xf32>
    %207 = vector.extract_strided_slice %82 {offsets = [0, 13], sizes = [2, 1], strides = [1, 1]} : vector<2x49xf32> to vector<2x1xf32>
    %208 = vector.broadcast %207 : vector<2x1xf32> to vector<2x256xf32>
    %209 = arith.mulf %206, %208 : vector<2x256xf32>
    %210 = arith.addf %201, %209 : vector<2x256xf32>
    %cst_26 = arith.constant 0.000000e+00 : f32
    %211 = vector.shape_cast %21 : vector<1x256xi1> to vector<1x256xi1>
    %212 = vector.broadcast %211 : vector<1x256xi1> to vector<2x256xi1>
    %213 = vector.broadcast %cst_26 : f32 to vector<2x256xf32>
    %214 = arith.select %212, %210, %213 : vector<2x256xi1>, vector<2x256xf32>
    %215 = arith.addf %148, %214 : vector<2x256xf32>
    %c19_i32_27 = arith.constant 19 : i32
    %216 = tpu.dynamic_rotate %8 by %c19_i32_27 dim 1 : vector<2x256xf32>, i32 -> vector<2x256xf32>
    %cst_28 = arith.constant 0.000000e+00 : f32
    %217 = vector.shape_cast %51 : vector<1x256xi1> to vector<1x256xi1>
    %218 = vector.broadcast %217 : vector<1x256xi1> to vector<2x256xi1>
    %219 = vector.broadcast %cst_28 : f32 to vector<2x256xf32>
    %220 = arith.select %218, %216, %219 : vector<2x256xi1>, vector<2x256xf32>
    %221 = vector.extract_strided_slice %82 {offsets = [0, 14], sizes = [2, 1], strides = [1, 1]} : vector<2x49xf32> to vector<2x1xf32>
    %222 = vector.broadcast %221 : vector<2x1xf32> to vector<2x256xf32>
    %223 = arith.mulf %220, %222 : vector<2x256xf32>
    %c18_i32_29 = arith.constant 18 : i32
    %224 = tpu.dynamic_rotate %8 by %c18_i32_29 dim 1 : vector<2x256xf32>, i32 -> vector<2x256xf32>
    %cst_30 = arith.constant 0.000000e+00 : f32
    %225 = vector.shape_cast %56 : vector<1x256xi1> to vector<1x256xi1>
    %226 = vector.broadcast %225 : vector<1x256xi1> to vector<2x256xi1>
    %227 = vector.broadcast %cst_30 : f32 to vector<2x256xf32>
    %228 = arith.select %226, %224, %227 : vector<2x256xi1>, vector<2x256xf32>
    %229 = vector.extract_strided_slice %82 {offsets = [0, 15], sizes = [2, 1], strides = [1, 1]} : vector<2x49xf32> to vector<2x1xf32>
    %230 = vector.broadcast %229 : vector<2x1xf32> to vector<2x256xf32>
    %231 = arith.mulf %228, %230 : vector<2x256xf32>
    %232 = arith.addf %223, %231 : vector<2x256xf32>
    %c17_i32_31 = arith.constant 17 : i32
    %233 = tpu.dynamic_rotate %8 by %c17_i32_31 dim 1 : vector<2x256xf32>, i32 -> vector<2x256xf32>
    %cst_32 = arith.constant 0.000000e+00 : f32
    %234 = vector.shape_cast %61 : vector<1x256xi1> to vector<1x256xi1>
    %235 = vector.broadcast %234 : vector<1x256xi1> to vector<2x256xi1>
    %236 = vector.broadcast %cst_32 : f32 to vector<2x256xf32>
    %237 = arith.select %235, %233, %236 : vector<2x256xi1>, vector<2x256xf32>
    %238 = vector.extract_strided_slice %82 {offsets = [0, 16], sizes = [2, 1], strides = [1, 1]} : vector<2x49xf32> to vector<2x1xf32>
    %239 = vector.broadcast %238 : vector<2x1xf32> to vector<2x256xf32>
    %240 = arith.mulf %237, %239 : vector<2x256xf32>
    %241 = arith.addf %232, %240 : vector<2x256xf32>
    %c16_i32_33 = arith.constant 16 : i32
    %242 = tpu.dynamic_rotate %8 by %c16_i32_33 dim 1 : vector<2x256xf32>, i32 -> vector<2x256xf32>
    %cst_34 = arith.constant 0.000000e+00 : f32
    %243 = vector.shape_cast %66 : vector<1x256xi1> to vector<1x256xi1>
    %244 = vector.broadcast %243 : vector<1x256xi1> to vector<2x256xi1>
    %245 = vector.broadcast %cst_34 : f32 to vector<2x256xf32>
    %246 = arith.select %244, %242, %245 : vector<2x256xi1>, vector<2x256xf32>
    %247 = vector.extract_strided_slice %82 {offsets = [0, 17], sizes = [2, 1], strides = [1, 1]} : vector<2x49xf32> to vector<2x1xf32>
    %248 = vector.broadcast %247 : vector<2x1xf32> to vector<2x256xf32>
    %249 = arith.mulf %246, %248 : vector<2x256xf32>
    %250 = arith.addf %241, %249 : vector<2x256xf32>
    %c15_i32_35 = arith.constant 15 : i32
    %251 = tpu.dynamic_rotate %8 by %c15_i32_35 dim 1 : vector<2x256xf32>, i32 -> vector<2x256xf32>
    %cst_36 = arith.constant 0.000000e+00 : f32
    %252 = vector.shape_cast %71 : vector<1x256xi1> to vector<1x256xi1>
    %253 = vector.broadcast %252 : vector<1x256xi1> to vector<2x256xi1>
    %254 = vector.broadcast %cst_36 : f32 to vector<2x256xf32>
    %255 = arith.select %253, %251, %254 : vector<2x256xi1>, vector<2x256xf32>
    %256 = vector.extract_strided_slice %82 {offsets = [0, 18], sizes = [2, 1], strides = [1, 1]} : vector<2x49xf32> to vector<2x1xf32>
    %257 = vector.broadcast %256 : vector<2x1xf32> to vector<2x256xf32>
    %258 = arith.mulf %255, %257 : vector<2x256xf32>
    %259 = arith.addf %250, %258 : vector<2x256xf32>
    %c14_i32_37 = arith.constant 14 : i32
    %260 = tpu.dynamic_rotate %8 by %c14_i32_37 dim 1 : vector<2x256xf32>, i32 -> vector<2x256xf32>
    %cst_38 = arith.constant 0.000000e+00 : f32
    %261 = vector.shape_cast %76 : vector<1x256xi1> to vector<1x256xi1>
    %262 = vector.broadcast %261 : vector<1x256xi1> to vector<2x256xi1>
    %263 = vector.broadcast %cst_38 : f32 to vector<2x256xf32>
    %264 = arith.select %262, %260, %263 : vector<2x256xi1>, vector<2x256xf32>
    %265 = vector.extract_strided_slice %82 {offsets = [0, 19], sizes = [2, 1], strides = [1, 1]} : vector<2x49xf32> to vector<2x1xf32>
    %266 = vector.broadcast %265 : vector<2x1xf32> to vector<2x256xf32>
    %267 = arith.mulf %264, %266 : vector<2x256xf32>
    %268 = arith.addf %259, %267 : vector<2x256xf32>
    %c13_i32_39 = arith.constant 13 : i32
    %269 = tpu.dynamic_rotate %8 by %c13_i32_39 dim 1 : vector<2x256xf32>, i32 -> vector<2x256xf32>
    %cst_40 = arith.constant 0.000000e+00 : f32
    %270 = vector.shape_cast %81 : vector<1x256xi1> to vector<1x256xi1>
    %271 = vector.broadcast %270 : vector<1x256xi1> to vector<2x256xi1>
    %272 = vector.broadcast %cst_40 : f32 to vector<2x256xf32>
    %273 = arith.select %271, %269, %272 : vector<2x256xi1>, vector<2x256xf32>
    %274 = vector.extract_strided_slice %82 {offsets = [0, 20], sizes = [2, 1], strides = [1, 1]} : vector<2x49xf32> to vector<2x1xf32>
    %275 = vector.broadcast %274 : vector<2x1xf32> to vector<2x256xf32>
    %276 = arith.mulf %273, %275 : vector<2x256xf32>
    %277 = arith.addf %268, %276 : vector<2x256xf32>
    %cst_41 = arith.constant 0.000000e+00 : f32
    %278 = vector.shape_cast %26 : vector<1x256xi1> to vector<1x256xi1>
    %279 = vector.broadcast %278 : vector<1x256xi1> to vector<2x256xi1>
    %280 = vector.broadcast %cst_41 : f32 to vector<2x256xf32>
    %281 = arith.select %279, %277, %280 : vector<2x256xi1>, vector<2x256xf32>
    %282 = arith.addf %215, %281 : vector<2x256xf32>
    %c3_i32_42 = arith.constant 3 : i32
    %283 = tpu.dynamic_rotate %8 by %c3_i32_42 dim 1 : vector<2x256xf32>, i32 -> vector<2x256xf32>
    %cst_43 = arith.constant 0.000000e+00 : f32
    %284 = vector.shape_cast %51 : vector<1x256xi1> to vector<1x256xi1>
    %285 = vector.broadcast %284 : vector<1x256xi1> to vector<2x256xi1>
    %286 = vector.broadcast %cst_43 : f32 to vector<2x256xf32>
    %287 = arith.select %285, %283, %286 : vector<2x256xi1>, vector<2x256xf32>
    %288 = vector.extract_strided_slice %82 {offsets = [0, 21], sizes = [2, 1], strides = [1, 1]} : vector<2x49xf32> to vector<2x1xf32>
    %289 = vector.broadcast %288 : vector<2x1xf32> to vector<2x256xf32>
    %290 = arith.mulf %287, %289 : vector<2x256xf32>
    %c2_i32_44 = arith.constant 2 : i32
    %291 = tpu.dynamic_rotate %8 by %c2_i32_44 dim 1 : vector<2x256xf32>, i32 -> vector<2x256xf32>
    %cst_45 = arith.constant 0.000000e+00 : f32
    %292 = vector.shape_cast %56 : vector<1x256xi1> to vector<1x256xi1>
    %293 = vector.broadcast %292 : vector<1x256xi1> to vector<2x256xi1>
    %294 = vector.broadcast %cst_45 : f32 to vector<2x256xf32>
    %295 = arith.select %293, %291, %294 : vector<2x256xi1>, vector<2x256xf32>
    %296 = vector.extract_strided_slice %82 {offsets = [0, 22], sizes = [2, 1], strides = [1, 1]} : vector<2x49xf32> to vector<2x1xf32>
    %297 = vector.broadcast %296 : vector<2x1xf32> to vector<2x256xf32>
    %298 = arith.mulf %295, %297 : vector<2x256xf32>
    %299 = arith.addf %290, %298 : vector<2x256xf32>
    %c1_i32_46 = arith.constant 1 : i32
    %300 = tpu.dynamic_rotate %8 by %c1_i32_46 dim 1 : vector<2x256xf32>, i32 -> vector<2x256xf32>
    %cst_47 = arith.constant 0.000000e+00 : f32
    %301 = vector.shape_cast %61 : vector<1x256xi1> to vector<1x256xi1>
    %302 = vector.broadcast %301 : vector<1x256xi1> to vector<2x256xi1>
    %303 = vector.broadcast %cst_47 : f32 to vector<2x256xf32>
    %304 = arith.select %302, %300, %303 : vector<2x256xi1>, vector<2x256xf32>
    %305 = vector.extract_strided_slice %82 {offsets = [0, 23], sizes = [2, 1], strides = [1, 1]} : vector<2x49xf32> to vector<2x1xf32>
    %306 = vector.broadcast %305 : vector<2x1xf32> to vector<2x256xf32>
    %307 = arith.mulf %304, %306 : vector<2x256xf32>
    %308 = arith.addf %299, %307 : vector<2x256xf32>
    %cst_48 = arith.constant 0.000000e+00 : f32
    %309 = vector.shape_cast %66 : vector<1x256xi1> to vector<1x256xi1>
    %310 = vector.broadcast %309 : vector<1x256xi1> to vector<2x256xi1>
    %311 = vector.broadcast %cst_48 : f32 to vector<2x256xf32>
    %312 = arith.select %310, %8, %311 : vector<2x256xi1>, vector<2x256xf32>
    %313 = vector.extract_strided_slice %82 {offsets = [0, 24], sizes = [2, 1], strides = [1, 1]} : vector<2x49xf32> to vector<2x1xf32>
    %314 = vector.broadcast %313 : vector<2x1xf32> to vector<2x256xf32>
    %315 = arith.mulf %312, %314 : vector<2x256xf32>
    %316 = arith.addf %308, %315 : vector<2x256xf32>
    %c255_i32 = arith.constant 255 : i32
    %317 = tpu.dynamic_rotate %8 by %c255_i32 dim 1 : vector<2x256xf32>, i32 -> vector<2x256xf32>
    %cst_49 = arith.constant 0.000000e+00 : f32
    %318 = vector.shape_cast %71 : vector<1x256xi1> to vector<1x256xi1>
    %319 = vector.broadcast %318 : vector<1x256xi1> to vector<2x256xi1>
    %320 = vector.broadcast %cst_49 : f32 to vector<2x256xf32>
    %321 = arith.select %319, %317, %320 : vector<2x256xi1>, vector<2x256xf32>
    %322 = vector.extract_strided_slice %82 {offsets = [0, 25], sizes = [2, 1], strides = [1, 1]} : vector<2x49xf32> to vector<2x1xf32>
    %323 = vector.broadcast %322 : vector<2x1xf32> to vector<2x256xf32>
    %324 = arith.mulf %321, %323 : vector<2x256xf32>
    %325 = arith.addf %316, %324 : vector<2x256xf32>
    %c254_i32 = arith.constant 254 : i32
    %326 = tpu.dynamic_rotate %8 by %c254_i32 dim 1 : vector<2x256xf32>, i32 -> vector<2x256xf32>
    %cst_50 = arith.constant 0.000000e+00 : f32
    %327 = vector.shape_cast %76 : vector<1x256xi1> to vector<1x256xi1>
    %328 = vector.broadcast %327 : vector<1x256xi1> to vector<2x256xi1>
    %329 = vector.broadcast %cst_50 : f32 to vector<2x256xf32>
    %330 = arith.select %328, %326, %329 : vector<2x256xi1>, vector<2x256xf32>
    %331 = vector.extract_strided_slice %82 {offsets = [0, 26], sizes = [2, 1], strides = [1, 1]} : vector<2x49xf32> to vector<2x1xf32>
    %332 = vector.broadcast %331 : vector<2x1xf32> to vector<2x256xf32>
    %333 = arith.mulf %330, %332 : vector<2x256xf32>
    %334 = arith.addf %325, %333 : vector<2x256xf32>
    %c253_i32 = arith.constant 253 : i32
    %335 = tpu.dynamic_rotate %8 by %c253_i32 dim 1 : vector<2x256xf32>, i32 -> vector<2x256xf32>
    %cst_51 = arith.constant 0.000000e+00 : f32
    %336 = vector.shape_cast %81 : vector<1x256xi1> to vector<1x256xi1>
    %337 = vector.broadcast %336 : vector<1x256xi1> to vector<2x256xi1>
    %338 = vector.broadcast %cst_51 : f32 to vector<2x256xf32>
    %339 = arith.select %337, %335, %338 : vector<2x256xi1>, vector<2x256xf32>
    %340 = vector.extract_strided_slice %82 {offsets = [0, 27], sizes = [2, 1], strides = [1, 1]} : vector<2x49xf32> to vector<2x1xf32>
    %341 = vector.broadcast %340 : vector<2x1xf32> to vector<2x256xf32>
    %342 = arith.mulf %339, %341 : vector<2x256xf32>
    %343 = arith.addf %334, %342 : vector<2x256xf32>
    %cst_52 = arith.constant 0.000000e+00 : f32
    %344 = vector.shape_cast %31 : vector<1x256xi1> to vector<1x256xi1>
    %345 = vector.broadcast %344 : vector<1x256xi1> to vector<2x256xi1>
    %346 = vector.broadcast %cst_52 : f32 to vector<2x256xf32>
    %347 = arith.select %345, %343, %346 : vector<2x256xi1>, vector<2x256xf32>
    %348 = arith.addf %282, %347 : vector<2x256xf32>
    %c243_i32 = arith.constant 243 : i32
    %349 = tpu.dynamic_rotate %8 by %c243_i32 dim 1 : vector<2x256xf32>, i32 -> vector<2x256xf32>
    %cst_53 = arith.constant 0.000000e+00 : f32
    %350 = vector.shape_cast %51 : vector<1x256xi1> to vector<1x256xi1>
    %351 = vector.broadcast %350 : vector<1x256xi1> to vector<2x256xi1>
    %352 = vector.broadcast %cst_53 : f32 to vector<2x256xf32>
    %353 = arith.select %351, %349, %352 : vector<2x256xi1>, vector<2x256xf32>
    %354 = vector.extract_strided_slice %82 {offsets = [0, 28], sizes = [2, 1], strides = [1, 1]} : vector<2x49xf32> to vector<2x1xf32>
    %355 = vector.broadcast %354 : vector<2x1xf32> to vector<2x256xf32>
    %356 = arith.mulf %353, %355 : vector<2x256xf32>
    %c242_i32 = arith.constant 242 : i32
    %357 = tpu.dynamic_rotate %8 by %c242_i32 dim 1 : vector<2x256xf32>, i32 -> vector<2x256xf32>
    %cst_54 = arith.constant 0.000000e+00 : f32
    %358 = vector.shape_cast %56 : vector<1x256xi1> to vector<1x256xi1>
    %359 = vector.broadcast %358 : vector<1x256xi1> to vector<2x256xi1>
    %360 = vector.broadcast %cst_54 : f32 to vector<2x256xf32>
    %361 = arith.select %359, %357, %360 : vector<2x256xi1>, vector<2x256xf32>
    %362 = vector.extract_strided_slice %82 {offsets = [0, 29], sizes = [2, 1], strides = [1, 1]} : vector<2x49xf32> to vector<2x1xf32>
    %363 = vector.broadcast %362 : vector<2x1xf32> to vector<2x256xf32>
    %364 = arith.mulf %361, %363 : vector<2x256xf32>
    %365 = arith.addf %356, %364 : vector<2x256xf32>
    %c241_i32 = arith.constant 241 : i32
    %366 = tpu.dynamic_rotate %8 by %c241_i32 dim 1 : vector<2x256xf32>, i32 -> vector<2x256xf32>
    %cst_55 = arith.constant 0.000000e+00 : f32
    %367 = vector.shape_cast %61 : vector<1x256xi1> to vector<1x256xi1>
    %368 = vector.broadcast %367 : vector<1x256xi1> to vector<2x256xi1>
    %369 = vector.broadcast %cst_55 : f32 to vector<2x256xf32>
    %370 = arith.select %368, %366, %369 : vector<2x256xi1>, vector<2x256xf32>
    %371 = vector.extract_strided_slice %82 {offsets = [0, 30], sizes = [2, 1], strides = [1, 1]} : vector<2x49xf32> to vector<2x1xf32>
    %372 = vector.broadcast %371 : vector<2x1xf32> to vector<2x256xf32>
    %373 = arith.mulf %370, %372 : vector<2x256xf32>
    %374 = arith.addf %365, %373 : vector<2x256xf32>
    %c240_i32_56 = arith.constant 240 : i32
    %375 = tpu.dynamic_rotate %8 by %c240_i32_56 dim 1 : vector<2x256xf32>, i32 -> vector<2x256xf32>
    %cst_57 = arith.constant 0.000000e+00 : f32
    %376 = vector.shape_cast %66 : vector<1x256xi1> to vector<1x256xi1>
    %377 = vector.broadcast %376 : vector<1x256xi1> to vector<2x256xi1>
    %378 = vector.broadcast %cst_57 : f32 to vector<2x256xf32>
    %379 = arith.select %377, %375, %378 : vector<2x256xi1>, vector<2x256xf32>
    %380 = vector.extract_strided_slice %82 {offsets = [0, 31], sizes = [2, 1], strides = [1, 1]} : vector<2x49xf32> to vector<2x1xf32>
    %381 = vector.broadcast %380 : vector<2x1xf32> to vector<2x256xf32>
    %382 = arith.mulf %379, %381 : vector<2x256xf32>
    %383 = arith.addf %374, %382 : vector<2x256xf32>
    %c239_i32 = arith.constant 239 : i32
    %384 = tpu.dynamic_rotate %8 by %c239_i32 dim 1 : vector<2x256xf32>, i32 -> vector<2x256xf32>
    %cst_58 = arith.constant 0.000000e+00 : f32
    %385 = vector.shape_cast %71 : vector<1x256xi1> to vector<1x256xi1>
    %386 = vector.broadcast %385 : vector<1x256xi1> to vector<2x256xi1>
    %387 = vector.broadcast %cst_58 : f32 to vector<2x256xf32>
    %388 = arith.select %386, %384, %387 : vector<2x256xi1>, vector<2x256xf32>
    %389 = vector.extract_strided_slice %82 {offsets = [0, 32], sizes = [2, 1], strides = [1, 1]} : vector<2x49xf32> to vector<2x1xf32>
    %390 = vector.broadcast %389 : vector<2x1xf32> to vector<2x256xf32>
    %391 = arith.mulf %388, %390 : vector<2x256xf32>
    %392 = arith.addf %383, %391 : vector<2x256xf32>
    %c238_i32 = arith.constant 238 : i32
    %393 = tpu.dynamic_rotate %8 by %c238_i32 dim 1 : vector<2x256xf32>, i32 -> vector<2x256xf32>
    %cst_59 = arith.constant 0.000000e+00 : f32
    %394 = vector.shape_cast %76 : vector<1x256xi1> to vector<1x256xi1>
    %395 = vector.broadcast %394 : vector<1x256xi1> to vector<2x256xi1>
    %396 = vector.broadcast %cst_59 : f32 to vector<2x256xf32>
    %397 = arith.select %395, %393, %396 : vector<2x256xi1>, vector<2x256xf32>
    %398 = vector.extract_strided_slice %82 {offsets = [0, 33], sizes = [2, 1], strides = [1, 1]} : vector<2x49xf32> to vector<2x1xf32>
    %399 = vector.broadcast %398 : vector<2x1xf32> to vector<2x256xf32>
    %400 = arith.mulf %397, %399 : vector<2x256xf32>
    %401 = arith.addf %392, %400 : vector<2x256xf32>
    %c237_i32 = arith.constant 237 : i32
    %402 = tpu.dynamic_rotate %8 by %c237_i32 dim 1 : vector<2x256xf32>, i32 -> vector<2x256xf32>
    %cst_60 = arith.constant 0.000000e+00 : f32
    %403 = vector.shape_cast %81 : vector<1x256xi1> to vector<1x256xi1>
    %404 = vector.broadcast %403 : vector<1x256xi1> to vector<2x256xi1>
    %405 = vector.broadcast %cst_60 : f32 to vector<2x256xf32>
    %406 = arith.select %404, %402, %405 : vector<2x256xi1>, vector<2x256xf32>
    %407 = vector.extract_strided_slice %82 {offsets = [0, 34], sizes = [2, 1], strides = [1, 1]} : vector<2x49xf32> to vector<2x1xf32>
    %408 = vector.broadcast %407 : vector<2x1xf32> to vector<2x256xf32>
    %409 = arith.mulf %406, %408 : vector<2x256xf32>
    %410 = arith.addf %401, %409 : vector<2x256xf32>
    %cst_61 = arith.constant 0.000000e+00 : f32
    %411 = vector.shape_cast %36 : vector<1x256xi1> to vector<1x256xi1>
    %412 = vector.broadcast %411 : vector<1x256xi1> to vector<2x256xi1>
    %413 = vector.broadcast %cst_61 : f32 to vector<2x256xf32>
    %414 = arith.select %412, %410, %413 : vector<2x256xi1>, vector<2x256xf32>
    %415 = arith.addf %348, %414 : vector<2x256xf32>
    %c227_i32 = arith.constant 227 : i32
    %416 = tpu.dynamic_rotate %8 by %c227_i32 dim 1 : vector<2x256xf32>, i32 -> vector<2x256xf32>
    %cst_62 = arith.constant 0.000000e+00 : f32
    %417 = vector.shape_cast %51 : vector<1x256xi1> to vector<1x256xi1>
    %418 = vector.broadcast %417 : vector<1x256xi1> to vector<2x256xi1>
    %419 = vector.broadcast %cst_62 : f32 to vector<2x256xf32>
    %420 = arith.select %418, %416, %419 : vector<2x256xi1>, vector<2x256xf32>
    %421 = vector.extract_strided_slice %82 {offsets = [0, 35], sizes = [2, 1], strides = [1, 1]} : vector<2x49xf32> to vector<2x1xf32>
    %422 = vector.broadcast %421 : vector<2x1xf32> to vector<2x256xf32>
    %423 = arith.mulf %420, %422 : vector<2x256xf32>
    %c226_i32 = arith.constant 226 : i32
    %424 = tpu.dynamic_rotate %8 by %c226_i32 dim 1 : vector<2x256xf32>, i32 -> vector<2x256xf32>
    %cst_63 = arith.constant 0.000000e+00 : f32
    %425 = vector.shape_cast %56 : vector<1x256xi1> to vector<1x256xi1>
    %426 = vector.broadcast %425 : vector<1x256xi1> to vector<2x256xi1>
    %427 = vector.broadcast %cst_63 : f32 to vector<2x256xf32>
    %428 = arith.select %426, %424, %427 : vector<2x256xi1>, vector<2x256xf32>
    %429 = vector.extract_strided_slice %82 {offsets = [0, 36], sizes = [2, 1], strides = [1, 1]} : vector<2x49xf32> to vector<2x1xf32>
    %430 = vector.broadcast %429 : vector<2x1xf32> to vector<2x256xf32>
    %431 = arith.mulf %428, %430 : vector<2x256xf32>
    %432 = arith.addf %423, %431 : vector<2x256xf32>
    %c225_i32 = arith.constant 225 : i32
    %433 = tpu.dynamic_rotate %8 by %c225_i32 dim 1 : vector<2x256xf32>, i32 -> vector<2x256xf32>
    %cst_64 = arith.constant 0.000000e+00 : f32
    %434 = vector.shape_cast %61 : vector<1x256xi1> to vector<1x256xi1>
    %435 = vector.broadcast %434 : vector<1x256xi1> to vector<2x256xi1>
    %436 = vector.broadcast %cst_64 : f32 to vector<2x256xf32>
    %437 = arith.select %435, %433, %436 : vector<2x256xi1>, vector<2x256xf32>
    %438 = vector.extract_strided_slice %82 {offsets = [0, 37], sizes = [2, 1], strides = [1, 1]} : vector<2x49xf32> to vector<2x1xf32>
    %439 = vector.broadcast %438 : vector<2x1xf32> to vector<2x256xf32>
    %440 = arith.mulf %437, %439 : vector<2x256xf32>
    %441 = arith.addf %432, %440 : vector<2x256xf32>
    %c224_i32_65 = arith.constant 224 : i32
    %442 = tpu.dynamic_rotate %8 by %c224_i32_65 dim 1 : vector<2x256xf32>, i32 -> vector<2x256xf32>
    %cst_66 = arith.constant 0.000000e+00 : f32
    %443 = vector.shape_cast %66 : vector<1x256xi1> to vector<1x256xi1>
    %444 = vector.broadcast %443 : vector<1x256xi1> to vector<2x256xi1>
    %445 = vector.broadcast %cst_66 : f32 to vector<2x256xf32>
    %446 = arith.select %444, %442, %445 : vector<2x256xi1>, vector<2x256xf32>
    %447 = vector.extract_strided_slice %82 {offsets = [0, 38], sizes = [2, 1], strides = [1, 1]} : vector<2x49xf32> to vector<2x1xf32>
    %448 = vector.broadcast %447 : vector<2x1xf32> to vector<2x256xf32>
    %449 = arith.mulf %446, %448 : vector<2x256xf32>
    %450 = arith.addf %441, %449 : vector<2x256xf32>
    %c223_i32 = arith.constant 223 : i32
    %451 = tpu.dynamic_rotate %8 by %c223_i32 dim 1 : vector<2x256xf32>, i32 -> vector<2x256xf32>
    %cst_67 = arith.constant 0.000000e+00 : f32
    %452 = vector.shape_cast %71 : vector<1x256xi1> to vector<1x256xi1>
    %453 = vector.broadcast %452 : vector<1x256xi1> to vector<2x256xi1>
    %454 = vector.broadcast %cst_67 : f32 to vector<2x256xf32>
    %455 = arith.select %453, %451, %454 : vector<2x256xi1>, vector<2x256xf32>
    %456 = vector.extract_strided_slice %82 {offsets = [0, 39], sizes = [2, 1], strides = [1, 1]} : vector<2x49xf32> to vector<2x1xf32>
    %457 = vector.broadcast %456 : vector<2x1xf32> to vector<2x256xf32>
    %458 = arith.mulf %455, %457 : vector<2x256xf32>
    %459 = arith.addf %450, %458 : vector<2x256xf32>
    %c222_i32 = arith.constant 222 : i32
    %460 = tpu.dynamic_rotate %8 by %c222_i32 dim 1 : vector<2x256xf32>, i32 -> vector<2x256xf32>
    %cst_68 = arith.constant 0.000000e+00 : f32
    %461 = vector.shape_cast %76 : vector<1x256xi1> to vector<1x256xi1>
    %462 = vector.broadcast %461 : vector<1x256xi1> to vector<2x256xi1>
    %463 = vector.broadcast %cst_68 : f32 to vector<2x256xf32>
    %464 = arith.select %462, %460, %463 : vector<2x256xi1>, vector<2x256xf32>
    %465 = vector.extract_strided_slice %82 {offsets = [0, 40], sizes = [2, 1], strides = [1, 1]} : vector<2x49xf32> to vector<2x1xf32>
    %466 = vector.broadcast %465 : vector<2x1xf32> to vector<2x256xf32>
    %467 = arith.mulf %464, %466 : vector<2x256xf32>
    %468 = arith.addf %459, %467 : vector<2x256xf32>
    %c221_i32 = arith.constant 221 : i32
    %469 = tpu.dynamic_rotate %8 by %c221_i32 dim 1 : vector<2x256xf32>, i32 -> vector<2x256xf32>
    %cst_69 = arith.constant 0.000000e+00 : f32
    %470 = vector.shape_cast %81 : vector<1x256xi1> to vector<1x256xi1>
    %471 = vector.broadcast %470 : vector<1x256xi1> to vector<2x256xi1>
    %472 = vector.broadcast %cst_69 : f32 to vector<2x256xf32>
    %473 = arith.select %471, %469, %472 : vector<2x256xi1>, vector<2x256xf32>
    %474 = vector.extract_strided_slice %82 {offsets = [0, 41], sizes = [2, 1], strides = [1, 1]} : vector<2x49xf32> to vector<2x1xf32>
    %475 = vector.broadcast %474 : vector<2x1xf32> to vector<2x256xf32>
    %476 = arith.mulf %473, %475 : vector<2x256xf32>
    %477 = arith.addf %468, %476 : vector<2x256xf32>
    %cst_70 = arith.constant 0.000000e+00 : f32
    %478 = vector.shape_cast %41 : vector<1x256xi1> to vector<1x256xi1>
    %479 = vector.broadcast %478 : vector<1x256xi1> to vector<2x256xi1>
    %480 = vector.broadcast %cst_70 : f32 to vector<2x256xf32>
    %481 = arith.select %479, %477, %480 : vector<2x256xi1>, vector<2x256xf32>
    %482 = arith.addf %415, %481 : vector<2x256xf32>
    %c211_i32 = arith.constant 211 : i32
    %483 = tpu.dynamic_rotate %8 by %c211_i32 dim 1 : vector<2x256xf32>, i32 -> vector<2x256xf32>
    %cst_71 = arith.constant 0.000000e+00 : f32
    %484 = vector.shape_cast %51 : vector<1x256xi1> to vector<1x256xi1>
    %485 = vector.broadcast %484 : vector<1x256xi1> to vector<2x256xi1>
    %486 = vector.broadcast %cst_71 : f32 to vector<2x256xf32>
    %487 = arith.select %485, %483, %486 : vector<2x256xi1>, vector<2x256xf32>
    %488 = vector.extract_strided_slice %82 {offsets = [0, 42], sizes = [2, 1], strides = [1, 1]} : vector<2x49xf32> to vector<2x1xf32>
    %489 = vector.broadcast %488 : vector<2x1xf32> to vector<2x256xf32>
    %490 = arith.mulf %487, %489 : vector<2x256xf32>
    %c210_i32 = arith.constant 210 : i32
    %491 = tpu.dynamic_rotate %8 by %c210_i32 dim 1 : vector<2x256xf32>, i32 -> vector<2x256xf32>
    %cst_72 = arith.constant 0.000000e+00 : f32
    %492 = vector.shape_cast %56 : vector<1x256xi1> to vector<1x256xi1>
    %493 = vector.broadcast %492 : vector<1x256xi1> to vector<2x256xi1>
    %494 = vector.broadcast %cst_72 : f32 to vector<2x256xf32>
    %495 = arith.select %493, %491, %494 : vector<2x256xi1>, vector<2x256xf32>
    %496 = vector.extract_strided_slice %82 {offsets = [0, 43], sizes = [2, 1], strides = [1, 1]} : vector<2x49xf32> to vector<2x1xf32>
    %497 = vector.broadcast %496 : vector<2x1xf32> to vector<2x256xf32>
    %498 = arith.mulf %495, %497 : vector<2x256xf32>
    %499 = arith.addf %490, %498 : vector<2x256xf32>
    %c209_i32 = arith.constant 209 : i32
    %500 = tpu.dynamic_rotate %8 by %c209_i32 dim 1 : vector<2x256xf32>, i32 -> vector<2x256xf32>
    %cst_73 = arith.constant 0.000000e+00 : f32
    %501 = vector.shape_cast %61 : vector<1x256xi1> to vector<1x256xi1>
    %502 = vector.broadcast %501 : vector<1x256xi1> to vector<2x256xi1>
    %503 = vector.broadcast %cst_73 : f32 to vector<2x256xf32>
    %504 = arith.select %502, %500, %503 : vector<2x256xi1>, vector<2x256xf32>
    %505 = vector.extract_strided_slice %82 {offsets = [0, 44], sizes = [2, 1], strides = [1, 1]} : vector<2x49xf32> to vector<2x1xf32>
    %506 = vector.broadcast %505 : vector<2x1xf32> to vector<2x256xf32>
    %507 = arith.mulf %504, %506 : vector<2x256xf32>
    %508 = arith.addf %499, %507 : vector<2x256xf32>
    %c208_i32_74 = arith.constant 208 : i32
    %509 = tpu.dynamic_rotate %8 by %c208_i32_74 dim 1 : vector<2x256xf32>, i32 -> vector<2x256xf32>
    %cst_75 = arith.constant 0.000000e+00 : f32
    %510 = vector.shape_cast %66 : vector<1x256xi1> to vector<1x256xi1>
    %511 = vector.broadcast %510 : vector<1x256xi1> to vector<2x256xi1>
    %512 = vector.broadcast %cst_75 : f32 to vector<2x256xf32>
    %513 = arith.select %511, %509, %512 : vector<2x256xi1>, vector<2x256xf32>
    %514 = vector.extract_strided_slice %82 {offsets = [0, 45], sizes = [2, 1], strides = [1, 1]} : vector<2x49xf32> to vector<2x1xf32>
    %515 = vector.broadcast %514 : vector<2x1xf32> to vector<2x256xf32>
    %516 = arith.mulf %513, %515 : vector<2x256xf32>
    %517 = arith.addf %508, %516 : vector<2x256xf32>
    %c207_i32 = arith.constant 207 : i32
    %518 = tpu.dynamic_rotate %8 by %c207_i32 dim 1 : vector<2x256xf32>, i32 -> vector<2x256xf32>
    %cst_76 = arith.constant 0.000000e+00 : f32
    %519 = vector.shape_cast %71 : vector<1x256xi1> to vector<1x256xi1>
    %520 = vector.broadcast %519 : vector<1x256xi1> to vector<2x256xi1>
    %521 = vector.broadcast %cst_76 : f32 to vector<2x256xf32>
    %522 = arith.select %520, %518, %521 : vector<2x256xi1>, vector<2x256xf32>
    %523 = vector.extract_strided_slice %82 {offsets = [0, 46], sizes = [2, 1], strides = [1, 1]} : vector<2x49xf32> to vector<2x1xf32>
    %524 = vector.broadcast %523 : vector<2x1xf32> to vector<2x256xf32>
    %525 = arith.mulf %522, %524 : vector<2x256xf32>
    %526 = arith.addf %517, %525 : vector<2x256xf32>
    %c206_i32 = arith.constant 206 : i32
    %527 = tpu.dynamic_rotate %8 by %c206_i32 dim 1 : vector<2x256xf32>, i32 -> vector<2x256xf32>
    %cst_77 = arith.constant 0.000000e+00 : f32
    %528 = vector.shape_cast %76 : vector<1x256xi1> to vector<1x256xi1>
    %529 = vector.broadcast %528 : vector<1x256xi1> to vector<2x256xi1>
    %530 = vector.broadcast %cst_77 : f32 to vector<2x256xf32>
    %531 = arith.select %529, %527, %530 : vector<2x256xi1>, vector<2x256xf32>
    %532 = vector.extract_strided_slice %82 {offsets = [0, 47], sizes = [2, 1], strides = [1, 1]} : vector<2x49xf32> to vector<2x1xf32>
    %533 = vector.broadcast %532 : vector<2x1xf32> to vector<2x256xf32>
    %534 = arith.mulf %531, %533 : vector<2x256xf32>
    %535 = arith.addf %526, %534 : vector<2x256xf32>
    %c205_i32 = arith.constant 205 : i32
    %536 = tpu.dynamic_rotate %8 by %c205_i32 dim 1 : vector<2x256xf32>, i32 -> vector<2x256xf32>
    %cst_78 = arith.constant 0.000000e+00 : f32
    %537 = vector.shape_cast %81 : vector<1x256xi1> to vector<1x256xi1>
    %538 = vector.broadcast %537 : vector<1x256xi1> to vector<2x256xi1>
    %539 = vector.broadcast %cst_78 : f32 to vector<2x256xf32>
    %540 = arith.select %538, %536, %539 : vector<2x256xi1>, vector<2x256xf32>
    %541 = vector.extract_strided_slice %82 {offsets = [0, 48], sizes = [2, 1], strides = [1, 1]} : vector<2x49xf32> to vector<2x1xf32>
    %542 = vector.broadcast %541 : vector<2x1xf32> to vector<2x256xf32>
    %543 = arith.mulf %540, %542 : vector<2x256xf32>
    %544 = arith.addf %535, %543 : vector<2x256xf32>
    %cst_79 = arith.constant 0.000000e+00 : f32
    %545 = vector.shape_cast %46 : vector<1x256xi1> to vector<1x256xi1>
    %546 = vector.broadcast %545 : vector<1x256xi1> to vector<2x256xi1>
    %547 = vector.broadcast %cst_79 : f32 to vector<2x256xf32>
    %548 = arith.select %546, %544, %547 : vector<2x256xi1>, vector<2x256xf32>
    %549 = arith.addf %482, %548 : vector<2x256xf32>
    %cst_80 = arith.constant dense<0.000000e+00> : vector<256xf32>
    %550 = vector.multi_reduction <add>, %549, %cst_80 [0] : vector<2x256xf32> to vector<256xf32>
    %551 = vector.shape_cast %550 : vector<256xf32> to vector<1x256xf32>
    %552 = arith.negf %551 : vector<1x256xf32>
    %553 = math.exp %552 : vector<1x256xf32>
    %cst_81 = arith.constant 1.000000e+00 : f32
    %554 = vector.broadcast %cst_81 : f32 to vector<1x256xf32>
    %555 = arith.addf %554, %553 : vector<1x256xf32>
    %556 = arith.divf %554, %555 : vector<1x256xf32>
    %c0_82 = arith.constant 0 : index
    %c0_83 = arith.constant 0 : index
    %c0_84 = arith.constant 0 : index
    %557 = vector.load %arg1[%c0_82, %c0_83, %c0_84] : memref<1x4x256xf32, #tpu.memory_space<vmem>>, vector<1x4x256xf32>
    %558 = vector.shape_cast %557 : vector<1x4x256xf32> to vector<4x256xf32>
    %559 = vector.broadcast %556 : vector<1x256xf32> to vector<4x256xf32>
    %560 = arith.mulf %558, %559 : vector<4x256xf32>
    %c0_85 = arith.constant 0 : index
    %c0_86 = arith.constant 0 : index
    %c0_87 = arith.constant 0 : index
    %561 = vector.load %arg3[%c0_85, %c0_86, %c0_87] : memref<1x4x256xf32, #tpu.memory_space<vmem>>, vector<1x4x256xf32>
    %562 = vector.shape_cast %561 : vector<1x4x256xf32> to vector<4x256xf32>
    %563 = vector.shape_cast %560 : vector<4x256xf32> to vector<1x4x256xf32>
    tpu.vector_store %arg3[%c0_85, %c0_86, %c0_87], %563 {strides = array<i32>} : memref<1x4x256xf32, #tpu.memory_space<vmem>>, vector<1x4x256xf32>,
    return
  }
  func.func @transform_0(%arg0: i32) -> (i32, i32, i32) {
    %c0_i32 = arith.constant 0 : i32
    %c0_i32_0 = arith.constant 0 : i32
    %c0_i32_1 = arith.constant 0 : i32
    return %arg0, %c0_i32, %c0_i32_0 : i32, i32, i32
  }
  func.func @transform_1(%arg0: i32) -> (i32, i32) {
    %c0_i32 = arith.constant 0 : i32
    %c0_i32_0 = arith.constant 0 : i32
    %c0_i32_1 = arith.constant 0 : i32
    return %c0_i32, %c0_i32_0 : i32, i32
  }
  func.func @transform_2(%arg0: i32) -> (i32, i32, i32) {
    %c0_i32 = arith.constant 0 : i32
    %c0_i32_0 = arith.constant 0 : i32
    %c0_i32_1 = arith.constant 0 : i32
    return %arg0, %c0_i32, %c0_i32_0 : i32, i32, i32
  }
}

</mosaic_0001>

<llo_original>
// kernel: tpu_custom_call.1
$region0: #{tpu_custom_call.1}
  #allocation0 [shape = 'u32[]', space=smem, size = 0x4, offset = 0x4, fixed_abs, tag = 'smem constant byte address 0x4 - core index']
  #allocation1 [shape = 'u32[144,128]{1,0:T(1,128)}', space=vmem, size = 0x12000, scoped, tag = 'internal scratch']
  %s0 = inlined_call_operand.hbm [shape: f32[2,4,256], index: 0, kind: input, shape index: {}]
  %s1 = inlined_call_operand.vmem [shape: f32[2,49], index: 1, kind: input, shape index: {}]
  %s2 = inlined_call_operand.hbm [shape: f32[2,4,256], index: 2, kind: output, shape index: {}]
  %s3 = sld [smem:[#allocation0]]
  $region45: #{tpu_custom_call.1} parent=0
    _
  %s5 = ssub.s32 1, %s3
  %s6 = scalar_select 0, %s5, %s3
  $region1: #{tpu_custom_call.1} parent=0
    #allocation2 [shape = 'u8[8192]{0}', space=vmem, size = 0x2000, scoped, tag = 'input window, operand 0']
    #allocation3 [shape = 's32[2]{0}', space=sflag, size = 0x8, scoped, tag = 'scoped memory for tpu_custom_call.1']
    #allocation4 [shape = 's32[2]{0}', space=sflag, size = 0x8, scoped, tag = 'scoped memory for tpu_custom_call.1']
    #allocation5 [shape = 'u8[8192]{0}', space=vmem, size = 0x2000, scoped, tag = 'output window, operand 0']
    %7 = vsyncpa [#allocation3], 0
    %s8 = scalar_lea.sflag [#allocation3], 1
    %9 = vsyncpa %s8, 0
    %10 = vsyncpa [#allocation4], 0
    %s11 = scalar_lea.sflag [#allocation4], 1
    %12 = vsyncpa %s11, 0
    loop: start=0, step=1, limit=4
    $region2: #{tpu_custom_call.1} parent=1 // loop_pre_header
      _
    $region3: #{tpu_custom_call.1} parent=1 // loop_header
      %s14 = sphi 0, %s18
      %p15 = scmp.ge.s32.totalorder %s14, 4
      %s24 = sphi 0, %s26
      %s27 = sphi 0, %s24
      %s28 = sphi 0, %s27
      %s44 = sphi 0, %s28
      %s48 = sphi 0, %s48
      %s50 = sphi 0, %s48
      %s51 = sphi 0, %s50
      %s65 = sphi 0, %s51
      %s71 = sphi 0, %s73
      %s74 = sphi 0, %s71
      %s75 = sphi 0, %s74
      %s91 = sphi 0, %s75
    $region4: #{tpu_custom_call.1} parent=1 // loop_header_branch
      %17 = sbr.rel (%p15) target = $region8
    $region5: #{tpu_custom_call.1} parent=1 // loop_body
      %s19 = ssub.s32 %s14, 1
      %s20 = ssub.s32 %s14, 2
      %s21 = sadd.s32 %s14, 1
      %s22 = ssub.s32 %s14, %s21
      %p23 = scmp.eq.s32.totalorder %s22, 0
      %s25 = sadd.s32 %s24, 1
      %s26 = scalar_select %p23, %s24, %s25
      %p29 = pneg %p23
      %p30 = scmp.eq.s32.totalorder %s14, 1
      %p31 = por %p29, %p30
      %p32 = scmp.ne.s32.totalorder %s24, %s27
      %p33 = scmp.eq.s32.totalorder %s14, 0
      %p34 = por %p32, %p33
      %p35 = scmp.ne.s32.totalorder %s24, %s27
      %p36 = scmp.eq.s32.totalorder %s19, 1
      %p37 = por %p35, %p36
      %p38 = scmp.ne.s32.totalorder %s27, %s28
      %p39 = scmp.eq.s32.totalorder %s19, 0
      %p40 = por %p38, %p39
      %p41 = scmp.ne.s32.totalorder %s27, %s28
      %p42 = scmp.eq.s32.totalorder %s20, 1
      %p43 = por %p41, %p42
      %p45 = scmp.ne.s32.totalorder %s28, %s44
      %p46 = scmp.eq.s32.totalorder %s20, 0
      %p47 = por %p45, %p46
      %s49 = sadd.s32 %s48, 1
      %p52 = scmp.eq.s32.totalorder %s14, 1
      %p53 = scmp.ne.s32.totalorder %s48, %s50
      %p54 = scmp.eq.s32.totalorder %s14, 0
      %p55 = por %p53, %p54
      %p56 = scmp.ne.s32.totalorder %s48, %s50
      %p57 = scmp.eq.s32.totalorder %s19, 1
      %p58 = por %p56, %p57
      %p59 = scmp.ne.s32.totalorder %s50, %s51
      %p60 = scmp.eq.s32.totalorder %s19, 0
      %p61 = por %p59, %p60
      %p62 = scmp.ne.s32.totalorder %s50, %s51
      %p63 = scmp.eq.s32.totalorder %s20, 1
      %p64 = por %p62, %p63
      %p66 = scmp.ne.s32.totalorder %s51, %s65
      %p67 = scmp.eq.s32.totalorder %s20, 0
      %p68 = por %p66, %p67
      %s69 = ssub.s32 %s14, %s21
      %p70 = scmp.eq.s32.totalorder %s69, 0
      %s72 = sadd.s32 %s71, 1
      %s73 = scalar_select %p70, %s71, %s72
      %p76 = pneg %p70
      %p77 = scmp.eq.s32.totalorder %s14, 1
      %p78 = por %p76, %p77
      %p79 = scmp.ne.s32.totalorder %s71, %s74
      %p80 = scmp.eq.s32.totalorder %s14, 0
      %p81 = por %p79, %p80
      %p82 = scmp.ne.s32.totalorder %s71, %s74
      %p83 = scmp.eq.s32.totalorder %s19, 1
      %p84 = por %p82, %p83
      %p85 = scmp.ne.s32.totalorder %s74, %s75
      %p86 = scmp.eq.s32.totalorder %s19, 0
      %p87 = por %p85, %p86
      %p88 = scmp.ne.s32.totalorder %s74, %s75
      %p89 = scmp.eq.s32.totalorder %s20, 1
      %p90 = por %p88, %p89
      %p92 = scmp.ne.s32.totalorder %s75, %s91
      %p93 = scmp.eq.s32.totalorder %s20, 0
      %p94 = por %p92, %p93
      %p95 = scmp.le.s32.totalorder 1, %s14
      %p96 = scmp.lt.s32.totalorder %s14, 3
      %p97 = pnand %p95, %p96
      %p98 = pneg %p97
      // Predicated region
      $region9: #{tpu_custom_call.1} parent=5 // pred_check
        _
      $region10: #{tpu_custom_call.1} parent=5 // pred_check_branch
        %100 = sbr.rel (%p97) target = $region12
      $region11: #{tpu_custom_call.1} parent=5 // pred_region
        %s101 = ssub.s32 %s14, 1
        // Predicated region
        $region13: #{tpu_custom_call.1} parent=11 // pred_check
          %p102 = pneg %p61
        $region14: #{tpu_custom_call.1} parent=11 // pred_check_branch
          %104 = sbr.rel (%p102) target = $region16
        $region15: #{tpu_custom_call.1} parent=11 // pred_region
          _
        $region16: #{tpu_custom_call.1} parent=11 // pred_fallthru
          _
      $region12: #{tpu_custom_call.1} parent=5 // pred_fallthru
        _
      %p105 = scmp.lt.s32.totalorder %s14, 2
      // Predicated region
      $region17: #{tpu_custom_call.1} parent=5 // pred_check
        %p106 = pneg %p105
      $region18: #{tpu_custom_call.1} parent=5 // pred_check_branch
        %108 = sbr.rel (%p106) target = $region20
      $region19: #{tpu_custom_call.1} parent=5 // pred_region
        // Predicated region
        $region21: #{tpu_custom_call.1} parent=19 // pred_check
          %p109 = pneg %p34
        $region22: #{tpu_custom_call.1} parent=19 // pred_check_branch
          %111 = sbr.rel (%p109) target = $region24
        $region23: #{tpu_custom_call.1} parent=19 // pred_region
          %s112 = sand.u32 %s24, 1
          %s113 = scalar_lea.sflag [#allocation3], %s112
          %s114 = sand.u32 %s24, 1
          %s115 = smul.addr %s114, 8
          %s116 = scalar_lea.vmem [#allocation2], %s115
          %s118 = ssub.s32 128, 128
          %119 = vsyncadd %s113, %s118
          %s120 = smul.addr %s14, 2
          %s121 = smul.addr %s120, 64
          %s122 = scalar_lea.hbm %s0, %s121
          %s124 = sshll.u32 %s116, 4
          %s125 = int_to_ptr.vmem [resolvable:$true] %s124
          %127 = dma.hbm_to_vmem [thread:$0]  %s122, 128, %s125, %s113
        $region24: #{tpu_custom_call.1} parent=19 // pred_fallthru
          _
      $region20: #{tpu_custom_call.1} parent=5 // pred_fallthru
        _
      %p128 = scmp.le.s32.totalorder 1, %s14
      %p129 = scmp.lt.s32.totalorder %s14, 3
      %p130 = pnand %p128, %p129
      %p131 = pneg %p130
      // Predicated region
      $region25: #{tpu_custom_call.1} parent=5 // pred_check
        _
      $region26: #{tpu_custom_call.1} parent=5 // pred_check_branch
        %133 = sbr.rel (%p130) target = $region28
      $region27: #{tpu_custom_call.1} parent=5 // pred_region
        %s134 = ssub.s32 %s14, 1
        %s135 = sand.u32 %s27, 1
        %s136 = scalar_lea.sflag [#allocation3], %s135
        %s137 = sand.u32 %s27, 1
        %s138 = smul.addr %s137, 8
        %s139 = scalar_lea.vmem [#allocation2], %s138
        // Predicated region
        $region29: #{tpu_custom_call.1} parent=27 // pred_check
          %p140 = pneg %p40
        $region30: #{tpu_custom_call.1} parent=27 // pred_check_branch
          %142 = sbr.rel (%p140) target = $region32
        $region31: #{tpu_custom_call.1} parent=27 // pred_region
          %143 = dma.done %s136, 128
        $region32: #{tpu_custom_call.1} parent=27 // pred_fallthru
          _
        %s144 = sand.u32 %s27, 1
        %s145 = scalar_lea.sflag [#allocation3], %s144
        %s146 = sand.u32 %s27, 1
        %s147 = smul.addr %s146, 8
        %s148 = scalar_lea.vmem [#allocation2], %s147
        %p149 = pneg %p40
        %p150 = pneg %p37
        %p151 = pneg %p61
        %p152 = pneg %p58
        %p153 = pneg %p87
        %p154 = pneg %p84
        %s155 = sand.u32 %s74, 1
        %s156 = scalar_lea.sflag [#allocation4], %s155
        %s157 = sand.u32 %s74, 1
        %s158 = smul.addr %s157, 8
        %s159 = scalar_lea.vmem [#allocation5], %s158
        %v160 = vld [vmem:[%s139] sm:$0xff]
        %v162 = vcombine.high %v160, %v160
        %vm164 = vcmask 1043456
        %v165 = vsel %vm164, %v160, 0.0
        %v166 = vrot.slane %v165, 4
        %v167 = vadd.f32 %v165, %v166
        %v168 = vrot.slane %v167, 2
        %v169 = vadd.f32 %v167, %v168
        %v170 = vrot.slane %v169, 1
        %v171 = vadd.f32 %v169, %v170
        %v172 = vsel %vm164, %v162, 0.0
        %v173 = vrot.slane %v172, 4
        %v174 = vadd.f32 %v172, %v173
        %v175 = vrot.slane %v174, 2
        %v176 = vadd.f32 %v174, %v175
        %v177 = vrot.slane %v176, 1
        %v178 = vadd.f32 %v176, %v177
        %v179 = vmul.f32 %v171, 0.25
        %v180 = vmul.f32 %v178, 0.25
        %v181 = vsel %vm164, %v160, -inf
        %v182 = vrot.slane %v181, 4
        %v183 = vmax.f32 %v181, %v182
        %v184 = vrot.slane %v183, 2
        %v185 = vmax.f32 %v183, %v184
        %v186 = vrot.slane %v185, 1
        %v187 = vmax.f32 %v185, %v186
        %v188 = vsel %vm164, %v162, -inf
        %v189 = vrot.slane %v188, 4
        %v190 = vmax.f32 %v188, %v189
        %v191 = vrot.slane %v190, 2
        %v192 = vmax.f32 %v190, %v191
        %v193 = vrot.slane %v192, 1
        %v194 = vmax.f32 %v192, %v193
        %vm195 = vcmask 1040384
        %v196 = vsel %vm195, %v179, %v187
        %v197 = vsel %vm195, %v180, %v194
        %v198 = vlaneseq
        %v199 = vand.u32 %v198, 127
        %v200 = vadd.s32 %v199, 128
        %v201 = vand.u32 %v199, 15
        %v202 = vand.u32 %v200, 15
        %vm203 = vcmp.ge.s32.totalorder %v199, 48
        %vm204 = vcmp.ge.s32.totalorder %v200, 48
        %vm205 = vcmp.lt.s32.totalorder %v199, 304
        %vm206 = vcmp.lt.s32.totalorder %v200, 304
        %vm207 = vmand %vm203, %vm205
        %vm208 = vmand %vm204, %vm206
        %vm209 = vcmp.ge.s32.totalorder %v199, 32
        %vm210 = vcmp.ge.s32.totalorder %v200, 32
        %vm211 = vcmp.lt.s32.totalorder %v199, 288
        %vm212 = vcmp.lt.s32.totalorder %v200, 288
        %vm213 = vmand %vm209, %vm211
        %vm214 = vmand %vm210, %vm212
        %vm215 = vcmp.ge.s32.totalorder %v199, 16
        %vm216 = vcmp.ge.s32.totalorder %v200, 16
        %vm217 = vcmp.lt.s32.totalorder %v199, 272
        %vm218 = vcmp.lt.s32.totalorder %v200, 272
        %vm219 = vmand %vm215, %vm217
        %vm220 = vmand %vm216, %vm218
        %vm221 = vcmp.ge.s32.totalorder %v199, 0
        %vm222 = vcmp.ge.s32.totalorder %v200, 0
        %vm223 = vcmp.lt.s32.totalorder %v199, 256
        %vm224 = vcmp.lt.s32.totalorder %v200, 256
        %vm225 = vmand %vm221, %vm223
        %vm226 = vmand %vm222, %vm224
        %vm227 = vcmp.ge.s32.totalorder %v199, 4294967280
        %vm228 = vcmp.ge.s32.totalorder %v200, 4294967280
        %vm229 = vcmp.lt.s32.totalorder %v199, 240
        %vm230 = vcmp.lt.s32.totalorder %v200, 240
        %vm231 = vmand %vm227, %vm229
        %vm232 = vmand %vm228, %vm230
        %vm233 = vcmp.ge.s32.totalorder %v199, 4294967264
        %vm234 = vcmp.ge.s32.totalorder %v200, 4294967264
        %vm235 = vcmp.lt.s32.totalorder %v199, 224
        %vm236 = vcmp.lt.s32.totalorder %v200, 224
        %vm237 = vmand %vm233, %vm235
        %vm238 = vmand %vm234, %vm236
        %vm239 = vcmp.ge.s32.totalorder %v199, 4294967248
        %vm240 = vcmp.ge.s32.totalorder %v200, 4294967248
        %vm241 = vcmp.lt.s32.totalorder %v199, 208
        %vm242 = vcmp.lt.s32.totalorder %v200, 208
        %vm243 = vmand %vm239, %vm241
        %vm244 = vmand %vm240, %vm242
        %vm245 = vcmp.ge.s32.totalorder %v201, 3
        %vm246 = vcmp.ge.s32.totalorder %v202, 3
        %vm247 = vcmp.lt.s32.totalorder %v201, 19
        %vm248 = vcmp.lt.s32.totalorder %v202, 19
        %vm249 = vmand %vm245, %vm247
        %vm250 = vmand %vm246, %vm248
        %vm251 = vcmp.ge.s32.totalorder %v201, 2
        %vm252 = vcmp.ge.s32.totalorder %v202, 2
        %vm253 = vcmp.lt.s32.totalorder %v201, 18
        %vm254 = vcmp.lt.s32.totalorder %v202, 18
        %vm255 = vmand %vm251, %vm253
        %vm256 = vmand %vm252, %vm254
        %vm257 = vcmp.ge.s32.totalorder %v201, 1
        %vm258 = vcmp.ge.s32.totalorder %v202, 1
        %vm259 = vcmp.lt.s32.totalorder %v201, 17
        %vm260 = vcmp.lt.s32.totalorder %v202, 17
        %vm261 = vmand %vm257, %vm259
        %vm262 = vmand %vm258, %vm260
        %vm263 = vcmp.ge.s32.totalorder %v201, 0
        %vm264 = vcmp.ge.s32.totalorder %v202, 0
        %vm265 = vcmp.lt.s32.totalorder %v201, 16
        %vm266 = vcmp.lt.s32.totalorder %v202, 16
        %vm267 = vmand %vm263, %vm265
        %vm268 = vmand %vm264, %vm266
        %vm269 = vcmp.ge.s32.totalorder %v201, 4294967295
        %vm270 = vcmp.ge.s32.totalorder %v202, 4294967295
        %vm271 = vcmp.lt.s32.totalorder %v201, 15
        %vm272 = vcmp.lt.s32.totalorder %v202, 15
        %vm273 = vmand %vm269, %vm271
        %vm274 = vmand %vm270, %vm272
        %vm275 = vcmp.ge.s32.totalorder %v201, 4294967294
        %vm276 = vcmp.ge.s32.totalorder %v202, 4294967294
        %vm277 = vcmp.lt.s32.totalorder %v201, 14
        %vm278 = vcmp.lt.s32.totalorder %v202, 14
        %vm279 = vmand %vm275, %vm277
        %vm280 = vmand %vm276, %vm278
        %vm281 = vcmp.ge.s32.totalorder %v201, 4294967293
        %vm282 = vcmp.ge.s32.totalorder %v202, 4294967293
        %vm283 = vcmp.lt.s32.totalorder %v201, 13
        %vm284 = vcmp.lt.s32.totalorder %v202, 13
        %vm285 = vmand %vm281, %vm283
        %vm286 = vmand %vm282, %vm284
        %v287 = vld [vmem:[%s1] sm:$0x3]
        %288 = vrot.lane.b32.xlu0 %v196, 51
        %v289 = vpop.permute.xlu0 %288
        %290 = vrot.lane.b32.xlu0 %v197, 51
        %v291 = vpop.permute.xlu0 %290
        %vm292 = vcmp.lt.s32.totalorder %v199, 51
        %v293 = vsel %vm292, %v289, %v291
        %v294 = vsel %vm292, %v291, %v289
        %v295 = vsel %vm249, 1, 0
        %v296 = vsel %vm250, 1, 0
        %vm297 = vcmp.eq.s32.totalorder %v295, 1
        %vm298 = vcmp.eq.s32.totalorder %v296, 1
        %v299 = vsel %vm297, %v294, 0.0
        %v300 = vsel %vm298, %v293, 0.0
        %302 = vset.pattern.permute.xlu0 0
        %303 = vperm.xlu0 %302, %v287
        %v304 = vpop.permute.xlu0 %303
        %v306 = vmul.f32 %v299, %v304
        %v307 = vmul.f32 %v300, %v304
        %308 = vrot.lane.b32.xlu0 %v196, 50
        %v309 = vpop.permute.xlu0 %308
        %310 = vrot.lane.b32.xlu0 %v197, 50
        %v311 = vpop.permute.xlu0 %310
        %vm312 = vcmp.lt.s32.totalorder %v199, 50
        %v313 = vsel %vm312, %v309, %v311
        %v314 = vsel %vm312, %v311, %v309
        %v315 = vsel %vm255, 1, 0
        %v316 = vsel %vm256, 1, 0
        %vm317 = vcmp.eq.s32.totalorder %v315, 1
        %vm318 = vcmp.eq.s32.totalorder %v316, 1
        %v319 = vsel %vm317, %v314, 0.0
        %v320 = vsel %vm318, %v313, 0.0
        %321 = vset.pattern.permute.xlu0 1
        %322 = vperm.xlu0 %321, %v287
        %v323 = vpop.permute.xlu0 %322
        %v325 = vmul.f32 %v319, %v323
        %v326 = vmul.f32 %v320, %v323
        %v327 = vadd.f32 %v306, %v325
        %v328 = vadd.f32 %v307, %v326
        %329 = vrot.lane.b32.xlu0 %v196, 49
        %v330 = vpop.permute.xlu0 %329
        %331 = vrot.lane.b32.xlu0 %v197, 49
        %v332 = vpop.permute.xlu0 %331
        %vm333 = vcmp.lt.s32.totalorder %v199, 49
        %v334 = vsel %vm333, %v330, %v332
        %v335 = vsel %vm333, %v332, %v330
        %v336 = vsel %vm261, 1, 0
        %v337 = vsel %vm262, 1, 0
        %vm338 = vcmp.eq.s32.totalorder %v336, 1
        %vm339 = vcmp.eq.s32.totalorder %v337, 1
        %v340 = vsel %vm338, %v335, 0.0
        %v341 = vsel %vm339, %v334, 0.0
        %342 = vset.pattern.permute.xlu0 2
        %343 = vperm.xlu0 %342, %v287
        %v344 = vpop.permute.xlu0 %343
        %v346 = vmul.f32 %v340, %v344
        %v347 = vmul.f32 %v341, %v344
        %v348 = vadd.f32 %v327, %v346
        %v349 = vadd.f32 %v328, %v347
        %350 = vrot.lane.b32.xlu0 %v196, 48
        %v351 = vpop.permute.xlu0 %350
        %352 = vrot.lane.b32.xlu0 %v197, 48
        %v353 = vpop.permute.xlu0 %352
        %vm354 = vcmp.lt.s32.totalorder %v199, 48
        %v355 = vsel %vm354, %v351, %v353
        %v356 = vsel %vm354, %v353, %v351
        %v357 = vsel %vm267, 1, 0
        %v358 = vsel %vm268, 1, 0
        %vm359 = vcmp.eq.s32.totalorder %v357, 1
        %vm360 = vcmp.eq.s32.totalorder %v358, 1
        %v361 = vsel %vm359, %v356, 0.0
        %v362 = vsel %vm360, %v355, 0.0
        %363 = vset.pattern.permute.xlu0 3
        %364 = vperm.xlu0 %363, %v287
        %v365 = vpop.permute.xlu0 %364
        %v367 = vmul.f32 %v361, %v365
        %v368 = vmul.f32 %v362, %v365
        %v369 = vadd.f32 %v348, %v367
        %v370 = vadd.f32 %v349, %v368
        %371 = vrot.lane.b32.xlu0 %v196, 47
        %v372 = vpop.permute.xlu0 %371
        %373 = vrot.lane.b32.xlu0 %v197, 47
        %v374 = vpop.permute.xlu0 %373
        %vm375 = vcmp.lt.s32.totalorder %v199, 47
        %v376 = vsel %vm375, %v372, %v374
        %v377 = vsel %vm375, %v374, %v372
        %v378 = vsel %vm273, 1, 0
        %v379 = vsel %vm274, 1, 0
        %vm380 = vcmp.eq.s32.totalorder %v378, 1
        %vm381 = vcmp.eq.s32.totalorder %v379, 1
        %v382 = vsel %vm380, %v377, 0.0
        %v383 = vsel %vm381, %v376, 0.0
        %384 = vset.pattern.permute.xlu0 4
        %385 = vperm.xlu0 %384, %v287
        %v386 = vpop.permute.xlu0 %385
        %v388 = vmul.f32 %v382, %v386
        %v389 = vmul.f32 %v383, %v386
        %v390 = vadd.f32 %v369, %v388
        %v391 = vadd.f32 %v370, %v389
        %392 = vrot.lane.b32.xlu0 %v196, 46
        %v393 = vpop.permute.xlu0 %392
        %394 = vrot.lane.b32.xlu0 %v197, 46
        %v395 = vpop.permute.xlu0 %394
        %vm396 = vcmp.lt.s32.totalorder %v199, 46
        %v397 = vsel %vm396, %v393, %v395
        %v398 = vsel %vm396, %v395, %v393
        %v399 = vsel %vm279, 1, 0
        %v400 = vsel %vm280, 1, 0
        %vm401 = vcmp.eq.s32.totalorder %v399, 1
        %vm402 = vcmp.eq.s32.totalorder %v400, 1
        %v403 = vsel %vm401, %v398, 0.0
        %v404 = vsel %vm402, %v397, 0.0
        %405 = vset.pattern.permute.xlu0 5
        %406 = vperm.xlu0 %405, %v287
        %v407 = vpop.permute.xlu0 %406
        %v409 = vmul.f32 %v403, %v407
        %v410 = vmul.f32 %v404, %v407
        %v411 = vadd.f32 %v390, %v409
        %v412 = vadd.f32 %v391, %v410
        %413 = vrot.lane.b32.xlu0 %v196, 45
        %v414 = vpop.permute.xlu0 %413
        %415 = vrot.lane.b32.xlu0 %v197, 45
        %v416 = vpop.permute.xlu0 %415
        %vm417 = vcmp.lt.s32.totalorder %v199, 45
        %v418 = vsel %vm417, %v414, %v416
        %v419 = vsel %vm417, %v416, %v414
        %v420 = vsel %vm285, 1, 0
        %v421 = vsel %vm286, 1, 0
        %vm422 = vcmp.eq.s32.totalorder %v420, 1
        %vm423 = vcmp.eq.s32.totalorder %v421, 1
        %v424 = vsel %vm422, %v419, 0.0
        %v425 = vsel %vm423, %v418, 0.0
        %426 = vset.pattern.permute.xlu0 6
        %427 = vperm.xlu0 %426, %v287
        %v428 = vpop.permute.xlu0 %427
        %v430 = vmul.f32 %v424, %v428
        %v431 = vmul.f32 %v425, %v428
        %v432 = vadd.f32 %v411, %v430
        %v433 = vadd.f32 %v412, %v431
        %v434 = vsel %vm207, 1, 0
        %v435 = vsel %vm208, 1, 0
        %vm436 = vcmp.eq.s32.totalorder %v434, 1
        %vm437 = vcmp.eq.s32.totalorder %v435, 1
        %v438 = vsel %vm436, %v432, 0.0
        %v439 = vsel %vm437, %v433, 0.0
        %440 = vrot.lane.b32.xlu0 %v196, 35
        %v441 = vpop.permute.xlu0 %440
        %442 = vrot.lane.b32.xlu0 %v197, 35
        %v443 = vpop.permute.xlu0 %442
        %vm444 = vcmp.lt.s32.totalorder %v199, 35
        %v445 = vsel %vm444, %v441, %v443
        %v446 = vsel %vm444, %v443, %v441
        %v447 = vsel %vm297, %v446, 0.0
        %v448 = vsel %vm298, %v445, 0.0
        %449 = vset.pattern.permute.xlu0 7
        %450 = vperm.xlu0 %449, %v287
        %v451 = vpop.permute.xlu0 %450
        %v453 = vmul.f32 %v447, %v451
        %v454 = vmul.f32 %v448, %v451
        %455 = vrot.lane.b32.xlu0 %v196, 34
        %v456 = vpop.permute.xlu0 %455
        %457 = vrot.lane.b32.xlu0 %v197, 34
        %v458 = vpop.permute.xlu0 %457
        %vm459 = vcmp.lt.s32.totalorder %v199, 34
        %v460 = vsel %vm459, %v456, %v458
        %v461 = vsel %vm459, %v458, %v456
        %v462 = vsel %vm317, %v461, 0.0
        %v463 = vsel %vm318, %v460, 0.0
        %464 = vset.pattern.permute.xlu0 8
        %465 = vperm.xlu0 %464, %v287
        %v466 = vpop.permute.xlu0 %465
        %v468 = vmul.f32 %v462, %v466
        %v469 = vmul.f32 %v463, %v466
        %v470 = vadd.f32 %v453, %v468
        %v471 = vadd.f32 %v454, %v469
        %472 = vrot.lane.b32.xlu0 %v196, 33
        %v473 = vpop.permute.xlu0 %472
        %474 = vrot.lane.b32.xlu0 %v197, 33
        %v475 = vpop.permute.xlu0 %474
        %vm476 = vcmp.lt.s32.totalorder %v199, 33
        %v477 = vsel %vm476, %v473, %v475
        %v478 = vsel %vm476, %v475, %v473
        %v479 = vsel %vm338, %v478, 0.0
        %v480 = vsel %vm339, %v477, 0.0
        %481 = vset.pattern.permute.xlu0 9
        %482 = vperm.xlu0 %481, %v287
        %v483 = vpop.permute.xlu0 %482
        %v485 = vmul.f32 %v479, %v483
        %v486 = vmul.f32 %v480, %v483
        %v487 = vadd.f32 %v470, %v485
        %v488 = vadd.f32 %v471, %v486
        %489 = vrot.lane.b32.xlu0 %v196, 32
        %v490 = vpop.permute.xlu0 %489
        %491 = vrot.lane.b32.xlu0 %v197, 32
        %v492 = vpop.permute.xlu0 %491
        %vm493 = vcmp.lt.s32.totalorder %v199, 32
        %v494 = vsel %vm493, %v490, %v492
        %v495 = vsel %vm493, %v492, %v490
        %v496 = vsel %vm359, %v495, 0.0
        %v497 = vsel %vm360, %v494, 0.0
        %498 = vset.pattern.permute.xlu0 10
        %499 = vperm.xlu0 %498, %v287
        %v500 = vpop.permute.xlu0 %499
        %v502 = vmul.f32 %v496, %v500
        %v503 = vmul.f32 %v497, %v500
        %v504 = vadd.f32 %v487, %v502
        %v505 = vadd.f32 %v488, %v503
        %506 = vrot.lane.b32.xlu0 %v196, 31
        %v507 = vpop.permute.xlu0 %506
        %508 = vrot.lane.b32.xlu0 %v197, 31
        %v509 = vpop.permute.xlu0 %508
        %vm510 = vcmp.lt.s32.totalorder %v199, 31
        %v511 = vsel %vm510, %v507, %v509
        %v512 = vsel %vm510, %v509, %v507
        %v513 = vsel %vm380, %v512, 0.0
        %v514 = vsel %vm381, %v511, 0.0
        %515 = vset.pattern.permute.xlu0 11
        %516 = vperm.xlu0 %515, %v287
        %v517 = vpop.permute.xlu0 %516
        %v519 = vmul.f32 %v513, %v517
        %v520 = vmul.f32 %v514, %v517
        %v521 = vadd.f32 %v504, %v519
        %v522 = vadd.f32 %v505, %v520
        %523 = vrot.lane.b32.xlu0 %v196, 30
        %v524 = vpop.permute.xlu0 %523
        %525 = vrot.lane.b32.xlu0 %v197, 30
        %v526 = vpop.permute.xlu0 %525
        %vm527 = vcmp.lt.s32.totalorder %v199, 30
        %v528 = vsel %vm527, %v524, %v526
        %v529 = vsel %vm527, %v526, %v524
        %v530 = vsel %vm401, %v529, 0.0
        %v531 = vsel %vm402, %v528, 0.0
        %532 = vset.pattern.permute.xlu0 12
        %533 = vperm.xlu0 %532, %v287
        %v534 = vpop.permute.xlu0 %533
        %v536 = vmul.f32 %v530, %v534
        %v537 = vmul.f32 %v531, %v534
        %v538 = vadd.f32 %v521, %v536
        %v539 = vadd.f32 %v522, %v537
        %540 = vrot.lane.b32.xlu0 %v196, 29
        %v541 = vpop.permute.xlu0 %540
        %542 = vrot.lane.b32.xlu0 %v197, 29
        %v543 = vpop.permute.xlu0 %542
        %vm544 = vcmp.lt.s32.totalorder %v199, 29
        %v545 = vsel %vm544, %v541, %v543
        %v546 = vsel %vm544, %v543, %v541
        %v547 = vsel %vm422, %v546, 0.0
        %v548 = vsel %vm423, %v545, 0.0
        %549 = vset.pattern.permute.xlu0 13
        %550 = vperm.xlu0 %549, %v287
        %v551 = vpop.permute.xlu0 %550
        %v553 = vmul.f32 %v547, %v551
        %v554 = vmul.f32 %v548, %v551
        %v555 = vadd.f32 %v538, %v553
        %v556 = vadd.f32 %v539, %v554
        %v557 = vsel %vm213, 1, 0
        %v558 = vsel %vm214, 1, 0
        %vm559 = vcmp.eq.s32.totalorder %v557, 1
        %vm560 = vcmp.eq.s32.totalorder %v558, 1
        %v561 = vsel %vm559, %v555, 0.0
        %v562 = vsel %vm560, %v556, 0.0
        %v563 = vadd.f32 %v438, %v561
        %v564 = vadd.f32 %v439, %v562
        %565 = vrot.lane.b32.xlu0 %v196, 19
        %v566 = vpop.permute.xlu0 %565
        %567 = vrot.lane.b32.xlu0 %v197, 19
        %v568 = vpop.permute.xlu0 %567
        %vm569 = vcmp.lt.s32.totalorder %v199, 19
        %v570 = vsel %vm569, %v566, %v568
        %v571 = vsel %vm569, %v568, %v566
        %v572 = vsel %vm297, %v571, 0.0
        %v573 = vsel %vm298, %v570, 0.0
        %574 = vset.pattern.permute.xlu0 14
        %575 = vperm.xlu0 %574, %v287
        %v576 = vpop.permute.xlu0 %575
        %v578 = vmul.f32 %v572, %v576
        %v579 = vmul.f32 %v573, %v576
        %580 = vrot.lane.b32.xlu0 %v196, 18
        %v581 = vpop.permute.xlu0 %580
        %582 = vrot.lane.b32.xlu0 %v197, 18
        %v583 = vpop.permute.xlu0 %582
        %vm584 = vcmp.lt.s32.totalorder %v199, 18
        %v585 = vsel %vm584, %v581, %v583
        %v586 = vsel %vm584, %v583, %v581
        %v587 = vsel %vm317, %v586, 0.0
        %v588 = vsel %vm318, %v585, 0.0
        %589 = vset.pattern.permute.xlu0 15
        %590 = vperm.xlu0 %589, %v287
        %v591 = vpop.permute.xlu0 %590
        %v593 = vmul.f32 %v587, %v591
        %v594 = vmul.f32 %v588, %v591
        %v595 = vadd.f32 %v578, %v593
        %v596 = vadd.f32 %v579, %v594
        %597 = vrot.lane.b32.xlu0 %v196, 17
        %v598 = vpop.permute.xlu0 %597
        %599 = vrot.lane.b32.xlu0 %v197, 17
        %v600 = vpop.permute.xlu0 %599
        %vm601 = vcmp.lt.s32.totalorder %v199, 17
        %v602 = vsel %vm601, %v598, %v600
        %v603 = vsel %vm601, %v600, %v598
        %v604 = vsel %vm338, %v603, 0.0
        %v605 = vsel %vm339, %v602, 0.0
        %606 = vset.pattern.permute.xlu0 16
        %607 = vperm.xlu0 %606, %v287
        %v608 = vpop.permute.xlu0 %607
        %v610 = vmul.f32 %v604, %v608
        %v611 = vmul.f32 %v605, %v608
        %v612 = vadd.f32 %v595, %v610
        %v613 = vadd.f32 %v596, %v611
        %614 = vrot.lane.b32.xlu0 %v196, 16
        %v615 = vpop.permute.xlu0 %614
        %616 = vrot.lane.b32.xlu0 %v197, 16
        %v617 = vpop.permute.xlu0 %616
        %vm618 = vcmp.lt.s32.totalorder %v199, 16
        %v619 = vsel %vm618, %v615, %v617
        %v620 = vsel %vm618, %v617, %v615
        %v621 = vsel %vm359, %v620, 0.0
        %v622 = vsel %vm360, %v619, 0.0
        %623 = vset.pattern.permute.xlu0 17
        %624 = vperm.xlu0 %623, %v287
        %v625 = vpop.permute.xlu0 %624
        %v627 = vmul.f32 %v621, %v625
        %v628 = vmul.f32 %v622, %v625
        %v629 = vadd.f32 %v612, %v627
        %v630 = vadd.f32 %v613, %v628
        %631 = vrot.lane.b32.xlu0 %v196, 15
        %v632 = vpop.permute.xlu0 %631
        %633 = vrot.lane.b32.xlu0 %v197, 15
        %v634 = vpop.permute.xlu0 %633
        %vm635 = vcmp.lt.s32.totalorder %v199, 15
        %v636 = vsel %vm635, %v632, %v634
        %v637 = vsel %vm635, %v634, %v632
        %v638 = vsel %vm380, %v637, 0.0
        %v639 = vsel %vm381, %v636, 0.0
        %640 = vset.pattern.permute.xlu0 18
        %641 = vperm.xlu0 %640, %v287
        %v642 = vpop.permute.xlu0 %641
        %v644 = vmul.f32 %v638, %v642
        %v645 = vmul.f32 %v639, %v642
        %v646 = vadd.f32 %v629, %v644
        %v647 = vadd.f32 %v630, %v645
        %648 = vrot.lane.b32.xlu0 %v196, 14
        %v649 = vpop.permute.xlu0 %648
        %650 = vrot.lane.b32.xlu0 %v197, 14
        %v651 = vpop.permute.xlu0 %650
        %vm652 = vcmp.lt.s32.totalorder %v199, 14
        %v653 = vsel %vm652, %v649, %v651
        %v654 = vsel %vm652, %v651, %v649
        %v655 = vsel %vm401, %v654, 0.0
        %v656 = vsel %vm402, %v653, 0.0
        %657 = vset.pattern.permute.xlu0 19
        %658 = vperm.xlu0 %657, %v287
        %v659 = vpop.permute.xlu0 %658
        %v661 = vmul.f32 %v655, %v659
        %v662 = vmul.f32 %v656, %v659
        %v663 = vadd.f32 %v646, %v661
        %v664 = vadd.f32 %v647, %v662
        %665 = vrot.lane.b32.xlu0 %v196, 13
        %v666 = vpop.permute.xlu0 %665
        %667 = vrot.lane.b32.xlu0 %v197, 13
        %v668 = vpop.permute.xlu0 %667
        %vm669 = vcmp.lt.s32.totalorder %v199, 13
        %v670 = vsel %vm669, %v666, %v668
        %v671 = vsel %vm669, %v668, %v666
        %v672 = vsel %vm422, %v671, 0.0
        %v673 = vsel %vm423, %v670, 0.0
        %674 = vset.pattern.permute.xlu0 20
        %675 = vperm.xlu0 %674, %v287
        %v676 = vpop.permute.xlu0 %675
        %v678 = vmul.f32 %v672, %v676
        %v679 = vmul.f32 %v673, %v676
        %v680 = vadd.f32 %v663, %v678
        %v681 = vadd.f32 %v664, %v679
        %v682 = vsel %vm219, 1, 0
        %v683 = vsel %vm220, 1, 0
        %vm684 = vcmp.eq.s32.totalorder %v682, 1
        %vm685 = vcmp.eq.s32.totalorder %v683, 1
        %v686 = vsel %vm684, %v680, 0.0
        %v687 = vsel %vm685, %v681, 0.0
        %v688 = vadd.f32 %v563, %v686
        %v689 = vadd.f32 %v564, %v687
        %690 = vrot.lane.b32.xlu0 %v196, 3
        %v691 = vpop.permute.xlu0 %690
        %692 = vrot.lane.b32.xlu0 %v197, 3
        %v693 = vpop.permute.xlu0 %692
        %vm694 = vcmp.lt.s32.totalorder %v199, 3
        %v695 = vsel %vm694, %v691, %v693
        %v696 = vsel %vm694, %v693, %v691
        %v697 = vsel %vm297, %v696, 0.0
        %v698 = vsel %vm298, %v695, 0.0
        %699 = vset.pattern.permute.xlu0 21
        %700 = vperm.xlu0 %699, %v287
        %v701 = vpop.permute.xlu0 %700
        %v703 = vmul.f32 %v697, %v701
        %v704 = vmul.f32 %v698, %v701
        %705 = vrot.lane.b32.xlu0 %v196, 2
        %v706 = vpop.permute.xlu0 %705
        %707 = vrot.lane.b32.xlu0 %v197, 2
        %v708 = vpop.permute.xlu0 %707
        %vm709 = vcmp.lt.s32.totalorder %v199, 2
        %v710 = vsel %vm709, %v706, %v708
        %v711 = vsel %vm709, %v708, %v706
        %v712 = vsel %vm317, %v711, 0.0
        %v713 = vsel %vm318, %v710, 0.0
        %714 = vset.pattern.permute.xlu0 22
        %715 = vperm.xlu0 %714, %v287
        %v716 = vpop.permute.xlu0 %715
        %v718 = vmul.f32 %v712, %v716
        %v719 = vmul.f32 %v713, %v716
        %v720 = vadd.f32 %v703, %v718
        %v721 = vadd.f32 %v704, %v719
        %722 = vrot.lane.b32.xlu0 %v196, 1
        %v723 = vpop.permute.xlu0 %722
        %724 = vrot.lane.b32.xlu0 %v197, 1
        %v725 = vpop.permute.xlu0 %724
        %vm726 = vcmp.lt.s32.totalorder %v199, 1
        %v727 = vsel %vm726, %v723, %v725
        %v728 = vsel %vm726, %v725, %v723
        %v729 = vsel %vm338, %v728, 0.0
        %v730 = vsel %vm339, %v727, 0.0
        %731 = vset.pattern.permute.xlu0 23
        %732 = vperm.xlu0 %731, %v287
        %v733 = vpop.permute.xlu0 %732
        %v735 = vmul.f32 %v729, %v733
        %v736 = vmul.f32 %v730, %v733
        %v737 = vadd.f32 %v720, %v735
        %v738 = vadd.f32 %v721, %v736
        %v739 = vsel %vm359, %v196, 0.0
        %v740 = vsel %vm360, %v197, 0.0
        %741 = vset.pattern.permute.xlu0 24
        %742 = vperm.xlu0 %741, %v287
        %v743 = vpop.permute.xlu0 %742
        %v745 = vmul.f32 %v739, %v743
        %v746 = vmul.f32 %v740, %v743
        %v747 = vadd.f32 %v737, %v745
        %v748 = vadd.f32 %v738, %v746
        %749 = vrot.lane.b32.xlu0 %v196, 127
        %v750 = vpop.permute.xlu0 %749
        %751 = vrot.lane.b32.xlu0 %v197, 127
        %v752 = vpop.permute.xlu0 %751
        %vm753 = vcmp.lt.s32.totalorder %v199, 127
        %v754 = vsel %vm753, %v750, %v752
        %v755 = vsel %vm753, %v752, %v750
        %v756 = vsel %vm380, %v754, 0.0
        %v757 = vsel %vm381, %v755, 0.0
        %758 = vset.pattern.permute.xlu0 25
        %759 = vperm.xlu0 %758, %v287
        %v760 = vpop.permute.xlu0 %759
        %v762 = vmul.f32 %v756, %v760
        %v763 = vmul.f32 %v757, %v760
        %v764 = vadd.f32 %v747, %v762
        %v765 = vadd.f32 %v748, %v763
        %766 = vrot.lane.b32.xlu0 %v196, 126
        %v767 = vpop.permute.xlu0 %766
        %768 = vrot.lane.b32.xlu0 %v197, 126
        %v769 = vpop.permute.xlu0 %768
        %vm770 = vcmp.lt.s32.totalorder %v199, 126
        %v771 = vsel %vm770, %v767, %v769
        %v772 = vsel %vm770, %v769, %v767
        %v773 = vsel %vm401, %v771, 0.0
        %v774 = vsel %vm402, %v772, 0.0
        %775 = vset.pattern.permute.xlu0 26
        %776 = vperm.xlu0 %775, %v287
        %v777 = vpop.permute.xlu0 %776
        %v779 = vmul.f32 %v773, %v777
        %v780 = vmul.f32 %v774, %v777
        %v781 = vadd.f32 %v764, %v779
        %v782 = vadd.f32 %v765, %v780
        %783 = vrot.lane.b32.xlu0 %v196, 125
        %v784 = vpop.permute.xlu0 %783
        %785 = vrot.lane.b32.xlu0 %v197, 125
        %v786 = vpop.permute.xlu0 %785
        %vm787 = vcmp.lt.s32.totalorder %v199, 125
        %v788 = vsel %vm787, %v784, %v786
        %v789 = vsel %vm787, %v786, %v784
        %v790 = vsel %vm422, %v788, 0.0
        %v791 = vsel %vm423, %v789, 0.0
        %792 = vset.pattern.permute.xlu0 27
        %793 = vperm.xlu0 %792, %v287
        %v794 = vpop.permute.xlu0 %793
        %v796 = vmul.f32 %v790, %v794
        %v797 = vmul.f32 %v791, %v794
        %v798 = vadd.f32 %v781, %v796
        %v799 = vadd.f32 %v782, %v797
        %v800 = vsel %vm225, 1, 0
        %v801 = vsel %vm226, 1, 0
        %vm802 = vcmp.eq.s32.totalorder %v800, 1
        %vm803 = vcmp.eq.s32.totalorder %v801, 1
        %v804 = vsel %vm802, %v798, 0.0
        %v805 = vsel %vm803, %v799, 0.0
        %v806 = vadd.f32 %v688, %v804
        %v807 = vadd.f32 %v689, %v805
        %808 = vrot.lane.b32.xlu0 %v196, 115
        %v809 = vpop.permute.xlu0 %808
        %810 = vrot.lane.b32.xlu0 %v197, 115
        %v811 = vpop.permute.xlu0 %810
        %vm812 = vcmp.lt.s32.totalorder %v199, 115
        %v813 = vsel %vm812, %v809, %v811
        %v814 = vsel %vm812, %v811, %v809
        %v815 = vsel %vm297, %v813, 0.0
        %v816 = vsel %vm298, %v814, 0.0
        %817 = vset.pattern.permute.xlu0 28
        %818 = vperm.xlu0 %817, %v287
        %v819 = vpop.permute.xlu0 %818
        %v821 = vmul.f32 %v815, %v819
        %v822 = vmul.f32 %v816, %v819
        %823 = vrot.lane.b32.xlu0 %v196, 114
        %v824 = vpop.permute.xlu0 %823
        %825 = vrot.lane.b32.xlu0 %v197, 114
        %v826 = vpop.permute.xlu0 %825
        %vm827 = vcmp.lt.s32.totalorder %v199, 114
        %v828 = vsel %vm827, %v824, %v826
        %v829 = vsel %vm827, %v826, %v824
        %v830 = vsel %vm317, %v828, 0.0
        %v831 = vsel %vm318, %v829, 0.0
        %832 = vset.pattern.permute.xlu0 29
        %833 = vperm.xlu0 %832, %v287
        %v834 = vpop.permute.xlu0 %833
        %v836 = vmul.f32 %v830, %v834
        %v837 = vmul.f32 %v831, %v834
        %v838 = vadd.f32 %v821, %v836
        %v839 = vadd.f32 %v822, %v837
        %840 = vrot.lane.b32.xlu0 %v196, 113
        %v841 = vpop.permute.xlu0 %840
        %842 = vrot.lane.b32.xlu0 %v197, 113
        %v843 = vpop.permute.xlu0 %842
        %vm844 = vcmp.lt.s32.totalorder %v199, 113
        %v845 = vsel %vm844, %v841, %v843
        %v846 = vsel %vm844, %v843, %v841
        %v847 = vsel %vm338, %v845, 0.0
        %v848 = vsel %vm339, %v846, 0.0
        %849 = vset.pattern.permute.xlu0 30
        %850 = vperm.xlu0 %849, %v287
        %v851 = vpop.permute.xlu0 %850
        %v853 = vmul.f32 %v847, %v851
        %v854 = vmul.f32 %v848, %v851
        %v855 = vadd.f32 %v838, %v853
        %v856 = vadd.f32 %v839, %v854
        %857 = vrot.lane.b32.xlu0 %v196, 112
        %v858 = vpop.permute.xlu0 %857
        %859 = vrot.lane.b32.xlu0 %v197, 112
        %v860 = vpop.permute.xlu0 %859
        %vm861 = vcmp.lt.s32.totalorder %v199, 112
        %v862 = vsel %vm861, %v858, %v860
        %v863 = vsel %vm861, %v860, %v858
        %v864 = vsel %vm359, %v862, 0.0
        %v865 = vsel %vm360, %v863, 0.0
        %866 = vset.pattern.permute.xlu0 31
        %867 = vperm.xlu0 %866, %v287
        %v868 = vpop.permute.xlu0 %867
        %v870 = vmul.f32 %v864, %v868
        %v871 = vmul.f32 %v865, %v868
        %v872 = vadd.f32 %v855, %v870
        %v873 = vadd.f32 %v856, %v871
        %874 = vrot.lane.b32.xlu0 %v196, 111
        %v875 = vpop.permute.xlu0 %874
        %876 = vrot.lane.b32.xlu0 %v197, 111
        %v877 = vpop.permute.xlu0 %876
        %vm878 = vcmp.lt.s32.totalorder %v199, 111
        %v879 = vsel %vm878, %v875, %v877
        %v880 = vsel %vm878, %v877, %v875
        %v881 = vsel %vm380, %v879, 0.0
        %v882 = vsel %vm381, %v880, 0.0
        %883 = vset.pattern.permute.xlu0 32
        %884 = vperm.xlu0 %883, %v287
        %v885 = vpop.permute.xlu0 %884
        %v887 = vmul.f32 %v881, %v885
        %v888 = vmul.f32 %v882, %v885
        %v889 = vadd.f32 %v872, %v887
        %v890 = vadd.f32 %v873, %v888
        %891 = vrot.lane.b32.xlu0 %v196, 110
        %v892 = vpop.permute.xlu0 %891
        %893 = vrot.lane.b32.xlu0 %v197, 110
        %v894 = vpop.permute.xlu0 %893
        %vm895 = vcmp.lt.s32.totalorder %v199, 110
        %v896 = vsel %vm895, %v892, %v894
        %v897 = vsel %vm895, %v894, %v892
        %v898 = vsel %vm401, %v896, 0.0
        %v899 = vsel %vm402, %v897, 0.0
        %900 = vset.pattern.permute.xlu0 33
        %901 = vperm.xlu0 %900, %v287
        %v902 = vpop.permute.xlu0 %901
        %v904 = vmul.f32 %v898, %v902
        %v905 = vmul.f32 %v899, %v902
        %v906 = vadd.f32 %v889, %v904
        %v907 = vadd.f32 %v890, %v905
        %908 = vrot.lane.b32.xlu0 %v196, 109
        %v909 = vpop.permute.xlu0 %908
        %910 = vrot.lane.b32.xlu0 %v197, 109
        %v911 = vpop.permute.xlu0 %910
        %vm912 = vcmp.lt.s32.totalorder %v199, 109
        %v913 = vsel %vm912, %v909, %v911
        %v914 = vsel %vm912, %v911, %v909
        %v915 = vsel %vm422, %v913, 0.0
        %v916 = vsel %vm423, %v914, 0.0
        %917 = vset.pattern.permute.xlu0 34
        %918 = vperm.xlu0 %917, %v287
        %v919 = vpop.permute.xlu0 %918
        %v921 = vmul.f32 %v915, %v919
        %v922 = vmul.f32 %v916, %v919
        %v923 = vadd.f32 %v906, %v921
        %v924 = vadd.f32 %v907, %v922
        %v925 = vsel %vm231, 1, 0
        %v926 = vsel %vm232, 1, 0
        %vm927 = vcmp.eq.s32.totalorder %v925, 1
        %vm928 = vcmp.eq.s32.totalorder %v926, 1
        %v929 = vsel %vm927, %v923, 0.0
        %v930 = vsel %vm928, %v924, 0.0
        %v931 = vadd.f32 %v806, %v929
        %v932 = vadd.f32 %v807, %v930
        %933 = vrot.lane.b32.xlu0 %v196, 99
        %v934 = vpop.permute.xlu0 %933
        %935 = vrot.lane.b32.xlu0 %v197, 99
        %v936 = vpop.permute.xlu0 %935
        %vm937 = vcmp.lt.s32.totalorder %v199, 99
        %v938 = vsel %vm937, %v934, %v936
        %v939 = vsel %vm937, %v936, %v934
        %v940 = vsel %vm297, %v938, 0.0
        %v941 = vsel %vm298, %v939, 0.0
        %942 = vset.pattern.permute.xlu0 35
        %943 = vperm.xlu0 %942, %v287
        %v944 = vpop.permute.xlu0 %943
        %v946 = vmul.f32 %v940, %v944
        %v947 = vmul.f32 %v941, %v944
        %948 = vrot.lane.b32.xlu0 %v196, 98
        %v949 = vpop.permute.xlu0 %948
        %950 = vrot.lane.b32.xlu0 %v197, 98
        %v951 = vpop.permute.xlu0 %950
        %vm952 = vcmp.lt.s32.totalorder %v199, 98
        %v953 = vsel %vm952, %v949, %v951
        %v954 = vsel %vm952, %v951, %v949
        %v955 = vsel %vm317, %v953, 0.0
        %v956 = vsel %vm318, %v954, 0.0
        %957 = vset.pattern.permute.xlu0 36
        %958 = vperm.xlu0 %957, %v287
        %v959 = vpop.permute.xlu0 %958
        %v961 = vmul.f32 %v955, %v959
        %v962 = vmul.f32 %v956, %v959
        %v963 = vadd.f32 %v946, %v961
        %v964 = vadd.f32 %v947, %v962
        %965 = vrot.lane.b32.xlu0 %v196, 97
        %v966 = vpop.permute.xlu0 %965
        %967 = vrot.lane.b32.xlu0 %v197, 97
        %v968 = vpop.permute.xlu0 %967
        %vm969 = vcmp.lt.s32.totalorder %v199, 97
        %v970 = vsel %vm969, %v966, %v968
        %v971 = vsel %vm969, %v968, %v966
        %v972 = vsel %vm338, %v970, 0.0
        %v973 = vsel %vm339, %v971, 0.0
        %974 = vset.pattern.permute.xlu0 37
        %975 = vperm.xlu0 %974, %v287
        %v976 = vpop.permute.xlu0 %975
        %v978 = vmul.f32 %v972, %v976
        %v979 = vmul.f32 %v973, %v976
        %v980 = vadd.f32 %v963, %v978
        %v981 = vadd.f32 %v964, %v979
        %982 = vrot.lane.b32.xlu0 %v196, 96
        %v983 = vpop.permute.xlu0 %982
        %984 = vrot.lane.b32.xlu0 %v197, 96
        %v985 = vpop.permute.xlu0 %984
        %vm986 = vcmp.lt.s32.totalorder %v199, 96
        %v987 = vsel %vm986, %v983, %v985
        %v988 = vsel %vm986, %v985, %v983
        %v989 = vsel %vm359, %v987, 0.0
        %v990 = vsel %vm360, %v988, 0.0
        %991 = vset.pattern.permute.xlu0 38
        %992 = vperm.xlu0 %991, %v287
        %v993 = vpop.permute.xlu0 %992
        %v995 = vmul.f32 %v989, %v993
        %v996 = vmul.f32 %v990, %v993
        %v997 = vadd.f32 %v980, %v995
        %v998 = vadd.f32 %v981, %v996
        %999 = vrot.lane.b32.xlu0 %v196, 95
        %v1000 = vpop.permute.xlu0 %999
        %1001 = vrot.lane.b32.xlu0 %v197, 95
        %v1002 = vpop.permute.xlu0 %1001
        %vm1003 = vcmp.lt.s32.totalorder %v199, 95
        %v1004 = vsel %vm1003, %v1000, %v1002
        %v1005 = vsel %vm1003, %v1002, %v1000
        %v1006 = vsel %vm380, %v1004, 0.0
        %v1007 = vsel %vm381, %v1005, 0.0
        %1008 = vset.pattern.permute.xlu0 39
        %1009 = vperm.xlu0 %1008, %v287
        %v1010 = vpop.permute.xlu0 %1009
        %v1012 = vmul.f32 %v1006, %v1010
        %v1013 = vmul.f32 %v1007, %v1010
        %v1014 = vadd.f32 %v997, %v1012
        %v1015 = vadd.f32 %v998, %v1013
        %1016 = vrot.lane.b32.xlu0 %v196, 94
        %v1017 = vpop.permute.xlu0 %1016
        %1018 = vrot.lane.b32.xlu0 %v197, 94
        %v1019 = vpop.permute.xlu0 %1018
        %vm1020 = vcmp.lt.s32.totalorder %v199, 94
        %v1021 = vsel %vm1020, %v1017, %v1019
        %v1022 = vsel %vm1020, %v1019, %v1017
        %v1023 = vsel %vm401, %v1021, 0.0
        %v1024 = vsel %vm402, %v1022, 0.0
        %1025 = vset.pattern.permute.xlu0 40
        %1026 = vperm.xlu0 %1025, %v287
        %v1027 = vpop.permute.xlu0 %1026
        %v1029 = vmul.f32 %v1023, %v1027
        %v1030 = vmul.f32 %v1024, %v1027
        %v1031 = vadd.f32 %v1014, %v1029
        %v1032 = vadd.f32 %v1015, %v1030
        %1033 = vrot.lane.b32.xlu0 %v196, 93
        %v1034 = vpop.permute.xlu0 %1033
        %1035 = vrot.lane.b32.xlu0 %v197, 93
        %v1036 = vpop.permute.xlu0 %1035
        %vm1037 = vcmp.lt.s32.totalorder %v199, 93
        %v1038 = vsel %vm1037, %v1034, %v1036
        %v1039 = vsel %vm1037, %v1036, %v1034
        %v1040 = vsel %vm422, %v1038, 0.0
        %v1041 = vsel %vm423, %v1039, 0.0
        %1042 = vset.pattern.permute.xlu0 41
        %1043 = vperm.xlu0 %1042, %v287
        %v1044 = vpop.permute.xlu0 %1043
        %v1046 = vmul.f32 %v1040, %v1044
        %v1047 = vmul.f32 %v1041, %v1044
        %v1048 = vadd.f32 %v1031, %v1046
        %v1049 = vadd.f32 %v1032, %v1047
        %v1050 = vsel %vm237, 1, 0
        %v1051 = vsel %vm238, 1, 0
        %vm1052 = vcmp.eq.s32.totalorder %v1050, 1
        %vm1053 = vcmp.eq.s32.totalorder %v1051, 1
        %v1054 = vsel %vm1052, %v1048, 0.0
        %v1055 = vsel %vm1053, %v1049, 0.0
        %v1056 = vadd.f32 %v931, %v1054
        %v1057 = vadd.f32 %v932, %v1055
        %1058 = vrot.lane.b32.xlu0 %v196, 83
        %v1059 = vpop.permute.xlu0 %1058
        %1060 = vrot.lane.b32.xlu0 %v197, 83
        %v1061 = vpop.permute.xlu0 %1060
        %vm1062 = vcmp.lt.s32.totalorder %v199, 83
        %v1063 = vsel %vm1062, %v1059, %v1061
        %v1064 = vsel %vm1062, %v1061, %v1059
        %v1065 = vsel %vm297, %v1063, 0.0
        %v1066 = vsel %vm298, %v1064, 0.0
        %1067 = vset.pattern.permute.xlu0 42
        %1068 = vperm.xlu0 %1067, %v287
        %v1069 = vpop.permute.xlu0 %1068
        %v1071 = vmul.f32 %v1065, %v1069
        %v1072 = vmul.f32 %v1066, %v1069
        %1073 = vrot.lane.b32.xlu0 %v196, 82
        %v1074 = vpop.permute.xlu0 %1073
        %1075 = vrot.lane.b32.xlu0 %v197, 82
        %v1076 = vpop.permute.xlu0 %1075
        %vm1077 = vcmp.lt.s32.totalorder %v199, 82
        %v1078 = vsel %vm1077, %v1074, %v1076
        %v1079 = vsel %vm1077, %v1076, %v1074
        %v1080 = vsel %vm317, %v1078, 0.0
        %v1081 = vsel %vm318, %v1079, 0.0
        %1082 = vset.pattern.permute.xlu0 43
        %1083 = vperm.xlu0 %1082, %v287
        %v1084 = vpop.permute.xlu0 %1083
        %v1086 = vmul.f32 %v1080, %v1084
        %v1087 = vmul.f32 %v1081, %v1084
        %v1088 = vadd.f32 %v1071, %v1086
        %v1089 = vadd.f32 %v1072, %v1087
        %1090 = vrot.lane.b32.xlu0 %v196, 81
        %v1091 = vpop.permute.xlu0 %1090
        %1092 = vrot.lane.b32.xlu0 %v197, 81
        %v1093 = vpop.permute.xlu0 %1092
        %vm1094 = vcmp.lt.s32.totalorder %v199, 81
        %v1095 = vsel %vm1094, %v1091, %v1093
        %v1096 = vsel %vm1094, %v1093, %v1091
        %v1097 = vsel %vm338, %v1095, 0.0
        %v1098 = vsel %vm339, %v1096, 0.0
        %1099 = vset.pattern.permute.xlu0 44
        %1100 = vperm.xlu0 %1099, %v287
        %v1101 = vpop.permute.xlu0 %1100
        %v1103 = vmul.f32 %v1097, %v1101
        %v1104 = vmul.f32 %v1098, %v1101
        %v1105 = vadd.f32 %v1088, %v1103
        %v1106 = vadd.f32 %v1089, %v1104
        %1107 = vrot.lane.b32.xlu0 %v196, 80
        %v1108 = vpop.permute.xlu0 %1107
        %1109 = vrot.lane.b32.xlu0 %v197, 80
        %v1110 = vpop.permute.xlu0 %1109
        %vm1111 = vcmp.lt.s32.totalorder %v199, 80
        %v1112 = vsel %vm1111, %v1108, %v1110
        %v1113 = vsel %vm1111, %v1110, %v1108
        %v1114 = vsel %vm359, %v1112, 0.0
        %v1115 = vsel %vm360, %v1113, 0.0
        %1116 = vset.pattern.permute.xlu0 45
        %1117 = vperm.xlu0 %1116, %v287
        %v1118 = vpop.permute.xlu0 %1117
        %v1120 = vmul.f32 %v1114, %v1118
        %v1121 = vmul.f32 %v1115, %v1118
        %v1122 = vadd.f32 %v1105, %v1120
        %v1123 = vadd.f32 %v1106, %v1121
        %1124 = vrot.lane.b32.xlu0 %v196, 79
        %v1125 = vpop.permute.xlu0 %1124
        %1126 = vrot.lane.b32.xlu0 %v197, 79
        %v1127 = vpop.permute.xlu0 %1126
        %vm1128 = vcmp.lt.s32.totalorder %v199, 79
        %v1129 = vsel %vm1128, %v1125, %v1127
        %v1130 = vsel %vm1128, %v1127, %v1125
        %v1131 = vsel %vm380, %v1129, 0.0
        %v1132 = vsel %vm381, %v1130, 0.0
        %1133 = vset.pattern.permute.xlu0 46
        %1134 = vperm.xlu0 %1133, %v287
        %v1135 = vpop.permute.xlu0 %1134
        %v1137 = vmul.f32 %v1131, %v1135
        %v1138 = vmul.f32 %v1132, %v1135
        %v1139 = vadd.f32 %v1122, %v1137
        %v1140 = vadd.f32 %v1123, %v1138
        %1141 = vrot.lane.b32.xlu0 %v196, 78
        %v1142 = vpop.permute.xlu0 %1141
        %1143 = vrot.lane.b32.xlu0 %v197, 78
        %v1144 = vpop.permute.xlu0 %1143
        %vm1145 = vcmp.lt.s32.totalorder %v199, 78
        %v1146 = vsel %vm1145, %v1142, %v1144
        %v1147 = vsel %vm1145, %v1144, %v1142
        %v1148 = vsel %vm401, %v1146, 0.0
        %v1149 = vsel %vm402, %v1147, 0.0
        %1150 = vset.pattern.permute.xlu0 47
        %1151 = vperm.xlu0 %1150, %v287
        %v1152 = vpop.permute.xlu0 %1151
        %v1154 = vmul.f32 %v1148, %v1152
        %v1155 = vmul.f32 %v1149, %v1152
        %v1156 = vadd.f32 %v1139, %v1154
        %v1157 = vadd.f32 %v1140, %v1155
        %1158 = vrot.lane.b32.xlu0 %v196, 77
        %v1159 = vpop.permute.xlu0 %1158
        %1160 = vrot.lane.b32.xlu0 %v197, 77
        %v1161 = vpop.permute.xlu0 %1160
        %vm1162 = vcmp.lt.s32.totalorder %v199, 77
        %v1163 = vsel %vm1162, %v1159, %v1161
        %v1164 = vsel %vm1162, %v1161, %v1159
        %v1165 = vsel %vm422, %v1163, 0.0
        %v1166 = vsel %vm423, %v1164, 0.0
        %1167 = vset.pattern.permute.xlu0 48
        %1168 = vperm.xlu0 %1167, %v287
        %v1169 = vpop.permute.xlu0 %1168
        %v1171 = vmul.f32 %v1165, %v1169
        %v1172 = vmul.f32 %v1166, %v1169
        %v1173 = vadd.f32 %v1156, %v1171
        %v1174 = vadd.f32 %v1157, %v1172
        %v1175 = vsel %vm243, 1, 0
        %v1176 = vsel %vm244, 1, 0
        %vm1177 = vcmp.eq.s32.totalorder %v1175, 1
        %vm1178 = vcmp.eq.s32.totalorder %v1176, 1
        %v1179 = vsel %vm1177, %v1173, 0.0
        %v1180 = vsel %vm1178, %v1174, 0.0
        %v1181 = vadd.f32 %v1056, %v1179
        %v1182 = vadd.f32 %v1057, %v1180
        %vm1183 = vcmask 1041408
        %v1184 = vsel %vm1183, %v1181, 0.0
        %v1185 = vrot.slane %v1184, 4
        %v1186 = vadd.f32 %v1184, %v1185
        %v1187 = vrot.slane %v1186, 2
        %v1188 = vadd.f32 %v1186, %v1187
        %v1189 = vrot.slane %v1188, 1
        %v1190 = vadd.f32 %v1188, %v1189
        %v1191 = vsel %vm1183, %v1182, 0.0
        %v1192 = vrot.slane %v1191, 4
        %v1193 = vadd.f32 %v1191, %v1192
        %v1194 = vrot.slane %v1193, 2
        %v1195 = vadd.f32 %v1193, %v1194
        %v1196 = vrot.slane %v1195, 1
        %v1197 = vadd.f32 %v1195, %v1196
        %v1198 = vxor.u32 %v1190, 2147483648
        %v1199 = vxor.u32 %v1197, 2147483648
        %v1200 = vmul.f32 %v1198, 1.442695
        %v1201 = vpow.pop %v1200
        %v1202 = vmul.f32 %v1199, 1.442695
        %v1203 = vpow.pop %v1202
        %v1204 = vadd.f32 %v1201, 1.0
        %v1205 = vadd.f32 %v1203, 1.0
        %v1206 = vrcp.pop %v1204
        %v1207 = vmul.f32 1.0, %v1206
        %v1208 = vrcp.pop %v1205
        %v1209 = vmul.f32 1.0, %v1208
        %v1212 = vcombine.low %v1207, %v1209
        %v1214 = vmul.f32 %v160, %v1212
        %1215 = vst [vmem:[%s159] sm:$0xff] %v1214
        %s1216 = sand.u32 %s74, 1
        %s1217 = scalar_lea.sflag [#allocation4], %s1216
        %s1218 = sand.u32 %s74, 1
        %s1219 = smul.addr %s1218, 8
        %s1220 = scalar_lea.vmem [#allocation5], %s1219
        // Predicated region
        $region33: #{tpu_custom_call.1} parent=27 // pred_check
          %p1221 = pneg %p84
        $region34: #{tpu_custom_call.1} parent=27 // pred_check_branch
          %1223 = sbr.rel (%p1221) target = $region36
        $region35: #{tpu_custom_call.1} parent=27 // pred_region
          %s1225 = ssub.s32 128, 128
          %1226 = vsyncadd %s1217, %s1225
          %s1227 = smul.addr %s19, 2
          %s1228 = smul.addr %s1227, 64
          %s1229 = scalar_lea.hbm %s2, %s1228
          %s1231 = sshll.u32 %s1220, 4
          %s1232 = int_to_ptr.vmem [resolvable:$true] %s1231
          %1234 = dma.vmem_to_hbm [thread:$0]  %s1232, 128, %s1229, %s1217
        $region36: #{tpu_custom_call.1} parent=27 // pred_fallthru
          _
      $region28: #{tpu_custom_call.1} parent=5 // pred_fallthru
        _
      %p1235 = scmp.le.s32.totalorder 2, %s14
      // Predicated region
      $region37: #{tpu_custom_call.1} parent=5 // pred_check
        %p1236 = pneg %p1235
      $region38: #{tpu_custom_call.1} parent=5 // pred_check_branch
        %1238 = sbr.rel (%p1236) target = $region40
      $region39: #{tpu_custom_call.1} parent=5 // pred_region
        %s1239 = ssub.s32 %s14, 2
        // Predicated region
        $region41: #{tpu_custom_call.1} parent=39 // pred_check
          %p1240 = pneg %p90
        $region42: #{tpu_custom_call.1} parent=39 // pred_check_branch
          %1242 = sbr.rel (%p1240) target = $region44
        $region43: #{tpu_custom_call.1} parent=39 // pred_region
          %s1243 = sand.u32 %s75, 1
          %s1244 = scalar_lea.sflag [#allocation4], %s1243
          %s1245 = sand.u32 %s75, 1
          %s1246 = smul.addr %s1245, 8
          %s1247 = scalar_lea.vmem [#allocation5], %s1246
          %1248 = dma.done %s1244, 128
        $region44: #{tpu_custom_call.1} parent=39 // pred_fallthru
          _
      $region40: #{tpu_custom_call.1} parent=5 // pred_fallthru
        _
    $region6: #{tpu_custom_call.1} parent=1 // loop_footer
      %s18 = sadd.s32 1, %s14
    $region7: #{tpu_custom_call.1} parent=1 // loop_footer_branch
      %13 = sbr.rel target = $region3
    $region8: #{tpu_custom_call.1} parent=1 // loop_exit
      _
    %1249 = vsyncpa [#allocation3], 1
    %s1250 = scalar_lea.sflag [#allocation3], 1
    %1251 = vsyncpa %s1250, 1
    %1252 = vsyncpa [#allocation4], 1
    %s1253 = scalar_lea.sflag [#allocation4], 1
    %1254 = vsyncpa %s1253, 1

</llo_original>
